<compile_context>
chip_gen: v5e
topology: v5e:2x2
jax: 0.10.0
libtpu: 0.0.40
codegen_flags: <defaults>
</compile_context>

<pallas_src>
import functools

import jax
import jax.numpy as jnp
import numpy as np
from jax.experimental import pallas as pl
from jax.experimental.pallas import tpu as pltpu

# Logical hidden sizes of the torch module and their lane-padded versions.
HID1, HID2, HID3 = 600, 300, 100
HID1_P, HID2_P, HID3_P = 640, 384, 128


def _round_up(x: int, m: int) -> int:
    return (x + m - 1) // m * m


def _pad2d(a, rows, cols):
    """Zero-pad a 2-D array up to (rows, cols)."""
    if a.shape == (rows, cols):
        return a
    out = jnp.zeros((rows, cols), a.dtype)
    return out.at[: a.shape[0], : a.shape[1]].set(a)


def _mlp_kernel(x_ref,
                w1_ref, b1_ref,
                w2_ref, b2_ref,
                w3_ref, b3_ref,
                w4_ref, b4_ref,
                o_ref):
    """Fused 4-layer MLP on one batch tile. All refs live in VMEM."""
    x = x_ref[...]                                                    # bf16 [TB, Din_p]

    # Layer 1: Linear -> (Dropout = identity in eval) -> ReLU
    h = jnp.dot(x, w1_ref[...], preferred_element_type=jnp.float32)  # f32 [TB, 640]
    h = jnp.maximum(h + b1_ref[...], 0.0).astype(jnp.bfloat16)

    # Layer 2
    h = jnp.dot(h, w2_ref[...], preferred_element_type=jnp.float32)  # f32 [TB, 384]
    h = jnp.maximum(h + b2_ref[...], 0.0).astype(jnp.bfloat16)

    # Layer 3
    h = jnp.dot(h, w3_ref[...], preferred_element_type=jnp.float32)  # f32 [TB, 128]
    h = jnp.maximum(h + b3_ref[...], 0.0).astype(jnp.bfloat16)

    # Output layer (no ReLU)
    y = jnp.dot(h, w4_ref[...], preferred_element_type=jnp.float32)  # f32 [TB, Dout_p]
    o_ref[...] = (y + b4_ref[...]).astype(o_ref.dtype)


@jax.jit
def three_layer_mlp_forward(x, w1, b1, w2, b2, w3, b3, w4, b4):
    """Forward pass matching the PyTorch module in eval mode.

    x : [B, input_dim] float32
    wN: torch layout [out_features, in_features] float32
    bN: [out_features] float32
    Returns [B, output_dim] float32.
    """
    B, din = x.shape
    dout = w4.shape[0]

    din_p = _round_up(din, 128)
    dout_p = _round_up(dout, 128)

    # Adaptive batch tile: big batches use 128-row tiles; small batches use a single
    # tile rounded to the bf16 sublane multiple (16) so we don't pad tiny demos to 128.
    tile_b = 128 if B >= 128 else _round_up(max(B, 16), 16)
    b_p = _round_up(B, tile_b)

    # --- layout prep: pad to lane multiples, weights pre-transposed to [in, out] ---
    x_p = _pad2d(x, b_p, din_p).astype(jnp.bfloat16)

    w1_p = _pad2d(w1.T, din_p, HID1_P).astype(jnp.bfloat16)
    w2_p = _pad2d(w2.T, HID1_P, HID2_P).astype(jnp.bfloat16)
    w3_p = _pad2d(w3.T, HID2_P, HID3_P).astype(jnp.bfloat16)
    w4_p = _pad2d(w4.T, HID3_P, dout_p).astype(jnp.bfloat16)

    b1_p = _pad2d(b1[None, :], 1, HID1_P).astype(jnp.float32)
    b2_p = _pad2d(b2[None, :], 1, HID2_P).astype(jnp.float32)
    b3_p = _pad2d(b3[None, :], 1, HID3_P).astype(jnp.float32)
    b4_p = _pad2d(b4[None, :], 1, dout_p).astype(jnp.float32)

    grid = (b_p // tile_b,)

    # Streaming spec for x / y; resident specs (index_map -> (0, 0)) for all params.
    x_spec = pl.BlockSpec((tile_b, din_p), lambda i: (i, 0))
    out_spec = pl.BlockSpec((tile_b, dout_p), lambda i: (i, 0))

    def resident(shape):
        return pl.BlockSpec(shape, lambda i: (0, 0))

    out_p = pl.pallas_call(
        _mlp_kernel,
        out_shape=jax.ShapeDtypeStruct((b_p, dout_p), jnp.float32),
        grid=grid,
        in_specs=[
            x_spec,
            resident((din_p, HID1_P)), resident((1, HID1_P)),
            resident((HID1_P, HID2_P)), resident((1, HID2_P)),
            resident((HID2_P, HID3_P)), resident((1, HID3_P)),
            resident((HID3_P, dout_p)), resident((1, dout_p)),
        ],
        out_specs=out_spec,
        compiler_params=pltpu.CompilerParams(
            dimension_semantics=("parallel",),
        ),
    )(x_p, w1_p, b1_p, w2_p, b2_p, w3_p, b3_p, w4_p, b4_p)

    return out_p[:B, :dout]


if __name__ == "__main__":
    key = jax.random.PRNGKey(0)
    keys = jax.random.split(key, 9)

    # Small, module-consistent demo shapes.
    input_dim, output_dim = 32, 10
    batch = 16

    def linear_init(kw, kb, fan_in, fan_out):
        bound = 1.0 / np.sqrt(fan_in)
        w = jax.random.uniform(kw, (fan_out, fan_in), jnp.float32, -bound, bound)
        b = jax.random.uniform(kb, (fan_out,), jnp.float32, -bound, bound)
        return w, b

    x = jax.random.normal(keys[0], (batch, input_dim), jnp.float32)
    w1, b1 = linear_init(keys[1], keys[2], input_dim, HID1)
    w2, b2 = linear_init(keys[3], keys[4], HID1, HID2)
    w3, b3 = linear_init(keys[5], keys[6], HID2, HID3)
    w4, b4 = linear_init(keys[7], keys[8], HID3, output_dim)

    out = three_layer_mlp_forward(x, w1, b1, w2, b2, w3, b3, w4, b4)
    out = jax.block_until_ready(out)

    # Pure-JAX f32 reference (Dropout is identity in eval mode).
    def ref(x):
        h = jnp.maximum(x @ w1.T + b1, 0.0)
        h = jnp.maximum(h @ w2.T + b2, 0.0)
        h = jnp.maximum(h @ w3.T + b3, 0.0)
        return h @ w4.T + b4

    expected = jax.block_until_ready(ref(x))
    if not np.allclose(np.asarray(out), np.asarray(expected), rtol=5e-2, atol=5e-2):
        raise AssertionError("Pallas MLP output does not match reference")

    print("KERNEL_OK")
</pallas_src>

<mosaic_0001>
module attributes {stable_mosaic.version = 11 : i64} {
  func.func @_mlp_kernel(%arg0: i32, %arg1: memref<16x128xbf16, #tpu.memory_space<vmem>>, %arg2: memref<128x640xbf16, #tpu.memory_space<vmem>>, %arg3: memref<1x640xf32, #tpu.memory_space<vmem>>, %arg4: memref<640x384xbf16, #tpu.memory_space<vmem>>, %arg5: memref<1x384xf32, #tpu.memory_space<vmem>>, %arg6: memref<384x128xbf16, #tpu.memory_space<vmem>>, %arg7: memref<1x128xf32, #tpu.memory_space<vmem>>, %arg8: memref<128x128xbf16, #tpu.memory_space<vmem>>, %arg9: memref<1x128xf32, #tpu.memory_space<vmem>>, %arg10: memref<16x128xf32, #tpu.memory_space<vmem>>) attributes {dimension_semantics = [#tpu.dimension_semantics<parallel>], iteration_bounds = array<i64: 1>, scalar_prefetch = 0 : i64, scratch_operands = 0 : i64, tpu.core_type = #tpu.core_type<tc>, window_params = [{transform_indices = @transform_0, window_bounds = array<i64: 16, 128>}, {pipeline_mode = #tpu.pipeline_mode<synchronous>, transform_indices = @transform_1, window_bounds = array<i64: 128, 640>}, {pipeline_mode = #tpu.pipeline_mode<synchronous>, transform_indices = @transform_2, window_bounds = array<i64: 1, 640>}, {pipeline_mode = #tpu.pipeline_mode<synchronous>, transform_indices = @transform_3, window_bounds = array<i64: 640, 384>}, {pipeline_mode = #tpu.pipeline_mode<synchronous>, transform_indices = @transform_4, window_bounds = array<i64: 1, 384>}, {pipeline_mode = #tpu.pipeline_mode<synchronous>, transform_indices = @transform_5, window_bounds = array<i64: 384, 128>}, {pipeline_mode = #tpu.pipeline_mode<synchronous>, transform_indices = @transform_6, window_bounds = array<i64: 1, 128>}, {pipeline_mode = #tpu.pipeline_mode<synchronous>, transform_indices = @transform_7, window_bounds = array<i64: 128, 128>}, {pipeline_mode = #tpu.pipeline_mode<synchronous>, transform_indices = @transform_8, window_bounds = array<i64: 1, 128>}, {transform_indices = @transform_9, window_bounds = array<i64: 16, 128>}]} {
    %c0 = arith.constant 0 : index
    %c0_0 = arith.constant 0 : index
    %0 = vector.load %arg1[%c0, %c0_0] : memref<16x128xbf16, #tpu.memory_space<vmem>>, vector<16x128xbf16>
    %c0_1 = arith.constant 0 : index
    %c0_2 = arith.constant 0 : index
    %1 = vector.load %arg2[%c0_1, %c0_2] : memref<128x640xbf16, #tpu.memory_space<vmem>>, vector<128x640xbf16>
    %cst = arith.constant dense<0.000000e+00> : vector<16x640xf32>
    %2 = tpu.matmul %0, %1, %cst {dimension_numbers = #tpu.dot_dimension_numbers<[1], [0], [0], [1], [0, 0, 1, 1], [], []>} : vector<16x128xbf16>, vector<128x640xbf16>, vector<16x640xf32> -> vector<16x640xf32>
    %c0_3 = arith.constant 0 : index
    %c0_4 = arith.constant 0 : index
    %3 = vector.load %arg3[%c0_3, %c0_4] : memref<1x640xf32, #tpu.memory_space<vmem>>, vector<1x640xf32>
    %4 = vector.broadcast %3 : vector<1x640xf32> to vector<16x640xf32>
    %5 = arith.addf %2, %4 : vector<16x640xf32>
    %cst_5 = arith.constant 0.000000e+00 : f32
    %6 = vector.broadcast %cst_5 : f32 to vector<16x640xf32>
    %7 = arith.maximumf %5, %6 : vector<16x640xf32>
    %8 = arith.truncf %7 : vector<16x640xf32> to vector<16x640xbf16>
    %c0_6 = arith.constant 0 : index
    %c0_7 = arith.constant 0 : index
    %9 = vector.load %arg4[%c0_6, %c0_7] : memref<640x384xbf16, #tpu.memory_space<vmem>>, vector<640x384xbf16>
    %cst_8 = arith.constant dense<0.000000e+00> : vector<16x384xf32>
    %10 = tpu.matmul %8, %9, %cst_8 {dimension_numbers = #tpu.dot_dimension_numbers<[1], [0], [0], [1], [0, 0, 1, 1], [], []>} : vector<16x640xbf16>, vector<640x384xbf16>, vector<16x384xf32> -> vector<16x384xf32>
    %c0_9 = arith.constant 0 : index
    %c0_10 = arith.constant 0 : index
    %11 = vector.load %arg5[%c0_9, %c0_10] : memref<1x384xf32, #tpu.memory_space<vmem>>, vector<1x384xf32>
    %12 = vector.broadcast %11 : vector<1x384xf32> to vector<16x384xf32>
    %13 = arith.addf %10, %12 : vector<16x384xf32>
    %cst_11 = arith.constant 0.000000e+00 : f32
    %14 = vector.broadcast %cst_11 : f32 to vector<16x384xf32>
    %15 = arith.maximumf %13, %14 : vector<16x384xf32>
    %16 = arith.truncf %15 : vector<16x384xf32> to vector<16x384xbf16>
    %c0_12 = arith.constant 0 : index
    %c0_13 = arith.constant 0 : index
    %17 = vector.load %arg6[%c0_12, %c0_13] : memref<384x128xbf16, #tpu.memory_space<vmem>>, vector<384x128xbf16>
    %cst_14 = arith.constant dense<0.000000e+00> : vector<16x128xf32>
    %18 = tpu.matmul %16, %17, %cst_14 {dimension_numbers = #tpu.dot_dimension_numbers<[1], [0], [0], [1], [0, 0, 1, 1], [], []>} : vector<16x384xbf16>, vector<384x128xbf16>, vector<16x128xf32> -> vector<16x128xf32>
    %c0_15 = arith.constant 0 : index
    %c0_16 = arith.constant 0 : index
    %19 = vector.load %arg7[%c0_15, %c0_16] : memref<1x128xf32, #tpu.memory_space<vmem>>, vector<1x128xf32>
    %20 = vector.broadcast %19 : vector<1x128xf32> to vector<16x128xf32>
    %21 = arith.addf %18, %20 : vector<16x128xf32>
    %cst_17 = arith.constant 0.000000e+00 : f32
    %22 = vector.broadcast %cst_17 : f32 to vector<16x128xf32>
    %23 = arith.maximumf %21, %22 : vector<16x128xf32>
    %24 = arith.truncf %23 : vector<16x128xf32> to vector<16x128xbf16>
    %c0_18 = arith.constant 0 : index
    %c0_19 = arith.constant 0 : index
    %25 = vector.load %arg8[%c0_18, %c0_19] : memref<128x128xbf16, #tpu.memory_space<vmem>>, vector<128x128xbf16>
    %cst_20 = arith.constant dense<0.000000e+00> : vector<16x128xf32>
    %26 = tpu.matmul %24, %25, %cst_20 {dimension_numbers = #tpu.dot_dimension_numbers<[1], [0], [0], [1], [0, 0, 1, 1], [], []>} : vector<16x128xbf16>, vector<128x128xbf16>, vector<16x128xf32> -> vector<16x128xf32>
    %c0_21 = arith.constant 0 : index
    %c0_22 = arith.constant 0 : index
    %27 = vector.load %arg9[%c0_21, %c0_22] : memref<1x128xf32, #tpu.memory_space<vmem>>, vector<1x128xf32>
    %28 = vector.broadcast %27 : vector<1x128xf32> to vector<16x128xf32>
    %29 = arith.addf %26, %28 : vector<16x128xf32>
    %c0_23 = arith.constant 0 : index
    %c0_24 = arith.constant 0 : index
    %30 = vector.load %arg10[%c0_23, %c0_24] : memref<16x128xf32, #tpu.memory_space<vmem>>, vector<16x128xf32>
    tpu.vector_store %arg10[%c0_23, %c0_24], %29 {strides = array<i32>} : memref<16x128xf32, #tpu.memory_space<vmem>>, vector<16x128xf32>,
    return
  }
  func.func @transform_0(%arg0: i32) -> (i32, i32) {
    %c0_i32 = arith.constant 0 : i32
    %c0_i32_0 = arith.constant 0 : i32
    return %arg0, %c0_i32 : i32, i32
  }
  func.func @transform_1(%arg0: i32) -> (i32, i32) {
    %c0_i32 = arith.constant 0 : i32
    %c0_i32_0 = arith.constant 0 : i32
    %c0_i32_1 = arith.constant 0 : i32
    return %c0_i32, %c0_i32_0 : i32, i32
  }
  func.func @transform_2(%arg0: i32) -> (i32, i32) {
    %c0_i32 = arith.constant 0 : i32
    %c0_i32_0 = arith.constant 0 : i32
    %c0_i32_1 = arith.constant 0 : i32
    return %c0_i32, %c0_i32_0 : i32, i32
  }
  func.func @transform_3(%arg0: i32) -> (i32, i32) {
    %c0_i32 = arith.constant 0 : i32
    %c0_i32_0 = arith.constant 0 : i32
    %c0_i32_1 = arith.constant 0 : i32
    return %c0_i32, %c0_i32_0 : i32, i32
  }
  func.func @transform_4(%arg0: i32) -> (i32, i32) {
    %c0_i32 = arith.constant 0 : i32
    %c0_i32_0 = arith.constant 0 : i32
    %c0_i32_1 = arith.constant 0 : i32
    return %c0_i32, %c0_i32_0 : i32, i32
  }
  func.func @transform_5(%arg0: i32) -> (i32, i32) {
    %c0_i32 = arith.constant 0 : i32
    %c0_i32_0 = arith.constant 0 : i32
    %c0_i32_1 = arith.constant 0 : i32
    return %c0_i32, %c0_i32_0 : i32, i32
  }
  func.func @transform_6(%arg0: i32) -> (i32, i32) {
    %c0_i32 = arith.constant 0 : i32
    %c0_i32_0 = arith.constant 0 : i32
    %c0_i32_1 = arith.constant 0 : i32
    return %c0_i32, %c0_i32_0 : i32, i32
  }
  func.func @transform_7(%arg0: i32) -> (i32, i32) {
    %c0_i32 = arith.constant 0 : i32
    %c0_i32_0 = arith.constant 0 : i32
    %c0_i32_1 = arith.constant 0 : i32
    return %c0_i32, %c0_i32_0 : i32, i32
  }
  func.func @transform_8(%arg0: i32) -> (i32, i32) {
    %c0_i32 = arith.constant 0 : i32
    %c0_i32_0 = arith.constant 0 : i32
    %c0_i32_1 = arith.constant 0 : i32
    return %c0_i32, %c0_i32_0 : i32, i32
  }
  func.func @transform_9(%arg0: i32) -> (i32, i32) {
    %c0_i32 = arith.constant 0 : i32
    %c0_i32_0 = arith.constant 0 : i32
    return %arg0, %c0_i32 : i32, i32
  }
}

</mosaic_0001>

<llo_original>
// kernel: three_layer_mlp_forward.1
$region0: #{three_layer_mlp_forward.1}
  #allocation0 [shape = 'u32[]', space=smem, size = 0x4, offset = 0x4, fixed_abs, tag = 'smem constant byte address 0x4 - core index']
  #allocation1 [shape = 'u32[72,128]{1,0:T(1,128)}', space=vmem, size = 0x9000, scoped, tag = 'internal scratch']
  %s0 = inlined_call_operand.vmem [shape: bf16[16,128], index: 0, kind: input, shape index: {}]
  %s1 = inlined_call_operand.vmem [shape: bf16[128,640], index: 1, kind: input, shape index: {}]
  %s2 = inlined_call_operand.vmem [shape: f32[1,640], index: 2, kind: input, shape index: {}]
  %s3 = inlined_call_operand.vmem [shape: bf16[640,384], index: 3, kind: input, shape index: {}]
  %s4 = inlined_call_operand.vmem [shape: f32[1,384], index: 4, kind: input, shape index: {}]
  %s5 = inlined_call_operand.vmem [shape: bf16[384,128], index: 5, kind: input, shape index: {}]
  %s6 = inlined_call_operand.vmem [shape: f32[1,128], index: 6, kind: input, shape index: {}]
  %s7 = inlined_call_operand.vmem [shape: bf16[128,128], index: 7, kind: input, shape index: {}]
  %s8 = inlined_call_operand.vmem [shape: f32[1,128], index: 8, kind: input, shape index: {}]
  %s9 = inlined_call_operand.hbm [shape: f32[16,128], index: 9, kind: output, shape index: {}]
  %s10 = sld [smem:[#allocation0]]
  $region46: #{three_layer_mlp_forward.1} parent=0
    _
  %s12 = ssub.s32 1, %s10
  %s13 = scalar_select 0, %s12, %s10
  $region1: #{three_layer_mlp_forward.1} parent=0
    #allocation2 [shape = 'u8[8192]{0}', space=vmem, size = 0x2000, scoped, tag = 'output window, operand 0, single buffered']
    #allocation3 [shape = 's32[1]{0}', space=sflag, size = 0x4, scoped, tag = 'scoped memory for three_layer_mlp_forward.1']
    %14 = vsyncpa [#allocation3], 0
    // Predicated region
    $region2: #{three_layer_mlp_forward.1} parent=1 // pred_check
      _
    $region3: #{three_layer_mlp_forward.1} parent=1 // pred_check_branch
      %16 = sbr.rel (0) target = $region5
    $region4: #{three_layer_mlp_forward.1} parent=1 // pred_region
      _
    $region5: #{three_layer_mlp_forward.1} parent=1 // pred_fallthru
      _
    // Predicated region
    $region6: #{three_layer_mlp_forward.1} parent=1 // pred_check
      _
    $region7: #{three_layer_mlp_forward.1} parent=1 // pred_check_branch
      %18 = sbr.rel (0) target = $region9
    $region8: #{three_layer_mlp_forward.1} parent=1 // pred_region
      _
    $region9: #{three_layer_mlp_forward.1} parent=1 // pred_fallthru
      _
    // Predicated region
    $region10: #{three_layer_mlp_forward.1} parent=1 // pred_check
      _
    $region11: #{three_layer_mlp_forward.1} parent=1 // pred_check_branch
      %20 = sbr.rel (0) target = $region13
    $region12: #{three_layer_mlp_forward.1} parent=1 // pred_region
      _
    $region13: #{three_layer_mlp_forward.1} parent=1 // pred_fallthru
      _
    // Predicated region
    $region14: #{three_layer_mlp_forward.1} parent=1 // pred_check
      _
    $region15: #{three_layer_mlp_forward.1} parent=1 // pred_check_branch
      %22 = sbr.rel (0) target = $region17
    $region16: #{three_layer_mlp_forward.1} parent=1 // pred_region
      _
    $region17: #{three_layer_mlp_forward.1} parent=1 // pred_fallthru
      _
    // Predicated region
    $region18: #{three_layer_mlp_forward.1} parent=1 // pred_check
      _
    $region19: #{three_layer_mlp_forward.1} parent=1 // pred_check_branch
      %24 = sbr.rel (0) target = $region21
    $region20: #{three_layer_mlp_forward.1} parent=1 // pred_region
      _
    $region21: #{three_layer_mlp_forward.1} parent=1 // pred_fallthru
      _
    // Predicated region
    $region22: #{three_layer_mlp_forward.1} parent=1 // pred_check
      _
    $region23: #{three_layer_mlp_forward.1} parent=1 // pred_check_branch
      %26 = sbr.rel (0) target = $region25
    $region24: #{three_layer_mlp_forward.1} parent=1 // pred_region
      _
    $region25: #{three_layer_mlp_forward.1} parent=1 // pred_fallthru
      _
    // Predicated region
    $region26: #{three_layer_mlp_forward.1} parent=1 // pred_check
      _
    $region27: #{three_layer_mlp_forward.1} parent=1 // pred_check_branch
      %28 = sbr.rel (0) target = $region29
    $region28: #{three_layer_mlp_forward.1} parent=1 // pred_region
      _
    $region29: #{three_layer_mlp_forward.1} parent=1 // pred_fallthru
      _
    // Predicated region
    $region30: #{three_layer_mlp_forward.1} parent=1 // pred_check
      _
    $region31: #{three_layer_mlp_forward.1} parent=1 // pred_check_branch
      %30 = sbr.rel (0) target = $region33
    $region32: #{three_layer_mlp_forward.1} parent=1 // pred_region
      _
    $region33: #{three_layer_mlp_forward.1} parent=1 // pred_fallthru
      _
    // Predicated region
    $region34: #{three_layer_mlp_forward.1} parent=1 // pred_check
      _
    $region35: #{three_layer_mlp_forward.1} parent=1 // pred_check_branch
      %32 = sbr.rel (0) target = $region37
    $region36: #{three_layer_mlp_forward.1} parent=1 // pred_region
      _
    $region37: #{three_layer_mlp_forward.1} parent=1 // pred_fallthru
      _
    %v33 = vld [vmem:[%s0] sm:$0xf]
    %v34 = vld [vmem:[%s0 + $0x4] sm:$0xf]
    %v35 = vld [vmem:[%s1] sm:$0xff]
    %v36 = vld [vmem:[%s1 + $0x8] sm:$0xff]
    %v37 = vld [vmem:[%s1 + $0x10] sm:$0xf]
    %v38 = vld [vmem:[%s1 + $0x14] sm:$0xff]
    %v39 = vld [vmem:[%s1 + $0x1c] sm:$0xff]
    %v40 = vld [vmem:[%s1 + $0x24] sm:$0xf]
    %v41 = vld [vmem:[%s1 + $0x28] sm:$0xff]
    %v42 = vld [vmem:[%s1 + $0x30] sm:$0xff]
    %v43 = vld [vmem:[%s1 + $0x38] sm:$0xf]
    %v44 = vld [vmem:[%s1 + $0x3c] sm:$0xff]
    %v45 = vld [vmem:[%s1 + $0x44] sm:$0xff]
    %v46 = vld [vmem:[%s1 + $0x4c] sm:$0xf]
    %v47 = vld [vmem:[%s1 + $0x50] sm:$0xff]
    %v48 = vld [vmem:[%s1 + $0x58] sm:$0xff]
    %v49 = vld [vmem:[%s1 + $0x60] sm:$0xf]
    %v50 = vld [vmem:[%s1 + $0x64] sm:$0xff]
    %v51 = vld [vmem:[%s1 + $0x6c] sm:$0xff]
    %v52 = vld [vmem:[%s1 + $0x74] sm:$0xf]
    %v53 = vld [vmem:[%s1 + $0x78] sm:$0xff]
    %v54 = vld [vmem:[%s1 + $0x80] sm:$0xff]
    %v55 = vld [vmem:[%s1 + $0x88] sm:$0xf]
    %v56 = vld [vmem:[%s1 + $0x8c] sm:$0xff]
    %v57 = vld [vmem:[%s1 + $0x94] sm:$0xff]
    %v58 = vld [vmem:[%s1 + $0x9c] sm:$0xf]
    %v59 = vld [vmem:[%s1 + $0xa0] sm:$0xff]
    %v60 = vld [vmem:[%s1 + $0xa8] sm:$0xff]
    %v61 = vld [vmem:[%s1 + $0xb0] sm:$0xf]
    %v62 = vld [vmem:[%s1 + $0xb4] sm:$0xff]
    %v63 = vld [vmem:[%s1 + $0xbc] sm:$0xff]
    %v64 = vld [vmem:[%s1 + $0xc4] sm:$0xf]
    %v65 = vld [vmem:[%s1 + $0xc8] sm:$0xff]
    %v66 = vld [vmem:[%s1 + $0xd0] sm:$0xff]
    %v67 = vld [vmem:[%s1 + $0xd8] sm:$0xf]
    %v68 = vld [vmem:[%s1 + $0xdc] sm:$0xff]
    %v69 = vld [vmem:[%s1 + $0xe4] sm:$0xff]
    %v70 = vld [vmem:[%s1 + $0xec] sm:$0xf]
    %v71 = vld [vmem:[%s1 + $0xf0] sm:$0xff]
    %v72 = vld [vmem:[%s1 + $0xf8] sm:$0xff]
    %v73 = vld [vmem:[%s1 + $0x100] sm:$0xf]
    %v74 = vld [vmem:[%s1 + $0x104] sm:$0xff]
    %v75 = vld [vmem:[%s1 + $0x10c] sm:$0xff]
    %v76 = vld [vmem:[%s1 + $0x114] sm:$0xf]
    %v77 = vld [vmem:[%s1 + $0x118] sm:$0xff]
    %v78 = vld [vmem:[%s1 + $0x120] sm:$0xff]
    %v79 = vld [vmem:[%s1 + $0x128] sm:$0xf]
    %v80 = vld [vmem:[%s1 + $0x12c] sm:$0xff]
    %v81 = vld [vmem:[%s1 + $0x134] sm:$0xff]
    %v82 = vld [vmem:[%s1 + $0x13c] sm:$0xf]
    %v83 = vld [vmem:[%s2] sm:$0x1f]
    %v85 = vperm.slane %v83, 0
    %v86 = vperm.slane %v83, 1
    %v87 = vperm.slane %v83, 2
    %v88 = vperm.slane %v83, 3
    %v89 = vperm.slane %v83, 4
    %v97 = vunpack.c.l.b16 %v33
    %v98 = vunpack.c.l.b16 %v34
    %v99 = vpack.c.b16 %v98, %v97
    %v149 = vunpack.c.l.b16 %v35
    %v150 = vunpack.c.h.b16 %v35
    %v151 = vunpack.c.l.b16 %v36
    %v152 = vunpack.c.h.b16 %v36
    %v153 = vunpack.c.l.b16 %v37
    %v154 = vunpack.c.l.b16 %v38
    %v155 = vunpack.c.h.b16 %v38
    %v156 = vunpack.c.l.b16 %v39
    %v157 = vunpack.c.h.b16 %v39
    %v158 = vunpack.c.l.b16 %v40
    %v159 = vunpack.c.l.b16 %v41
    %v160 = vunpack.c.h.b16 %v41
    %v161 = vunpack.c.l.b16 %v42
    %v162 = vunpack.c.h.b16 %v42
    %v163 = vunpack.c.l.b16 %v43
    %v164 = vunpack.c.l.b16 %v44
    %v165 = vunpack.c.h.b16 %v44
    %v166 = vunpack.c.l.b16 %v45
    %v167 = vunpack.c.h.b16 %v45
    %v168 = vunpack.c.l.b16 %v46
    %v169 = vunpack.c.l.b16 %v47
    %v170 = vunpack.c.h.b16 %v47
    %v171 = vunpack.c.l.b16 %v48
    %v172 = vunpack.c.h.b16 %v48
    %v173 = vunpack.c.l.b16 %v49
    %v174 = vunpack.c.l.b16 %v50
    %v175 = vunpack.c.h.b16 %v50
    %v176 = vunpack.c.l.b16 %v51
    %v177 = vunpack.c.h.b16 %v51
    %v178 = vunpack.c.l.b16 %v52
    %v179 = vunpack.c.l.b16 %v53
    %v180 = vunpack.c.h.b16 %v53
    %v181 = vunpack.c.l.b16 %v54
    %v182 = vunpack.c.h.b16 %v54
    %v183 = vunpack.c.l.b16 %v55
    %v184 = vunpack.c.l.b16 %v56
    %v185 = vunpack.c.h.b16 %v56
    %v186 = vunpack.c.l.b16 %v57
    %v187 = vunpack.c.h.b16 %v57
    %v188 = vunpack.c.l.b16 %v58
    %v189 = vunpack.c.l.b16 %v59
    %v190 = vunpack.c.h.b16 %v59
    %v191 = vunpack.c.l.b16 %v60
    %v192 = vunpack.c.h.b16 %v60
    %v193 = vunpack.c.l.b16 %v61
    %v194 = vunpack.c.l.b16 %v62
    %v195 = vunpack.c.h.b16 %v62
    %v196 = vunpack.c.l.b16 %v63
    %v197 = vunpack.c.h.b16 %v63
    %v198 = vunpack.c.l.b16 %v64
    %v199 = vunpack.c.l.b16 %v65
    %v200 = vunpack.c.h.b16 %v65
    %v201 = vunpack.c.l.b16 %v66
    %v202 = vunpack.c.h.b16 %v66
    %v203 = vunpack.c.l.b16 %v67
    %v204 = vunpack.c.l.b16 %v68
    %v205 = vunpack.c.h.b16 %v68
    %v206 = vunpack.c.l.b16 %v69
    %v207 = vunpack.c.h.b16 %v69
    %v208 = vunpack.c.l.b16 %v70
    %v209 = vunpack.c.l.b16 %v71
    %v210 = vunpack.c.h.b16 %v71
    %v211 = vunpack.c.l.b16 %v72
    %v212 = vunpack.c.h.b16 %v72
    %v213 = vunpack.c.l.b16 %v73
    %v214 = vunpack.c.l.b16 %v74
    %v215 = vunpack.c.h.b16 %v74
    %v216 = vunpack.c.l.b16 %v75
    %v217 = vunpack.c.h.b16 %v75
    %v218 = vunpack.c.l.b16 %v76
    %v219 = vunpack.c.l.b16 %v77
    %v220 = vunpack.c.h.b16 %v77
    %v221 = vunpack.c.l.b16 %v78
    %v222 = vunpack.c.h.b16 %v78
    %v223 = vunpack.c.l.b16 %v79
    %v224 = vunpack.c.l.b16 %v80
    %v225 = vunpack.c.h.b16 %v80
    %v226 = vunpack.c.l.b16 %v81
    %v227 = vunpack.c.h.b16 %v81
    %v228 = vunpack.c.l.b16 %v82
    %v229 = vpack.c.b16 %v154, %v149
    %v230 = vpack.c.b16 %v155, %v150
    %v231 = vpack.c.b16 %v156, %v151
    %v232 = vpack.c.b16 %v157, %v152
    %v233 = vpack.c.b16 %v158, %v153
    %v234 = vpack.c.b16 %v164, %v159
    %v235 = vpack.c.b16 %v165, %v160
    %v236 = vpack.c.b16 %v166, %v161
    %v237 = vpack.c.b16 %v167, %v162
    %v238 = vpack.c.b16 %v168, %v163
    %v239 = vpack.c.b16 %v174, %v169
    %v240 = vpack.c.b16 %v175, %v170
    %v241 = vpack.c.b16 %v176, %v171
    %v242 = vpack.c.b16 %v177, %v172
    %v243 = vpack.c.b16 %v178, %v173
    %v244 = vpack.c.b16 %v184, %v179
    %v245 = vpack.c.b16 %v185, %v180
    %v246 = vpack.c.b16 %v186, %v181
    %v247 = vpack.c.b16 %v187, %v182
    %v248 = vpack.c.b16 %v188, %v183
    %v249 = vpack.c.b16 %v194, %v189
    %v250 = vpack.c.b16 %v195, %v190
    %v251 = vpack.c.b16 %v196, %v191
    %v252 = vpack.c.b16 %v197, %v192
    %v253 = vpack.c.b16 %v198, %v193
    %v254 = vpack.c.b16 %v204, %v199
    %v255 = vpack.c.b16 %v205, %v200
    %v256 = vpack.c.b16 %v206, %v201
    %v257 = vpack.c.b16 %v207, %v202
    %v258 = vpack.c.b16 %v208, %v203
    %v259 = vpack.c.b16 %v214, %v209
    %v260 = vpack.c.b16 %v215, %v210
    %v261 = vpack.c.b16 %v216, %v211
    %v262 = vpack.c.b16 %v217, %v212
    %v263 = vpack.c.b16 %v218, %v213
    %v264 = vpack.c.b16 %v224, %v219
    %v265 = vpack.c.b16 %v225, %v220
    %v266 = vpack.c.b16 %v226, %v221
    %v267 = vpack.c.b16 %v227, %v222
    %v268 = vpack.c.b16 %v228, %v223
    %309 = vmatpush.bf16.msra.mxu0 %v264
    %310 = vmatpush.bf16.msra.mxu0 %v259
    %311 = vmatpush.bf16.msra.mxu0 %v254
    %312 = vmatpush.bf16.msra.mxu0 %v249
    %313 = vmatpush.bf16.msra.mxu0 %v244
    %314 = vmatpush.bf16.msra.mxu0 %v239
    %315 = vmatpush.bf16.msra.mxu0 %v234
    %316 = vmatpush.bf16.msra.mxu0 %v229
    %317 = vmatmul.bf16.gmra.mxu0 %v99
    %v318 = vpop.f32.mrf.mxu0
    %v319 = vadd.f32 %v85, %v318
    %v320 = vpop.f32.mrf.mxu0
    %v321 = vadd.f32 %v85, %v320
    %322 = vdwg.mxu0
    %323 = vmatpush.bf16.msra.mxu0 %v265
    %324 = vmatpush.bf16.msra.mxu0 %v260
    %325 = vmatpush.bf16.msra.mxu0 %v255
    %326 = vmatpush.bf16.msra.mxu0 %v250
    %327 = vmatpush.bf16.msra.mxu0 %v245
    %328 = vmatpush.bf16.msra.mxu0 %v240
    %329 = vmatpush.bf16.msra.mxu0 %v235
    %330 = vmatpush.bf16.msra.mxu0 %v230
    %331 = vmatmul.bf16.gmra.mxu0 %v99
    %v332 = vpop.f32.mrf.mxu0
    %v333 = vadd.f32 %v86, %v332
    %v334 = vpop.f32.mrf.mxu0
    %v335 = vadd.f32 %v86, %v334
    %336 = vdwg.mxu0
    %337 = vmatpush.bf16.msra.mxu0 %v266
    %338 = vmatpush.bf16.msra.mxu0 %v261
    %339 = vmatpush.bf16.msra.mxu0 %v256
    %340 = vmatpush.bf16.msra.mxu0 %v251
    %341 = vmatpush.bf16.msra.mxu0 %v246
    %342 = vmatpush.bf16.msra.mxu0 %v241
    %343 = vmatpush.bf16.msra.mxu0 %v236
    %344 = vmatpush.bf16.msra.mxu0 %v231
    %345 = vmatmul.bf16.gmra.mxu0 %v99
    %v346 = vpop.f32.mrf.mxu0
    %v347 = vadd.f32 %v87, %v346
    %v348 = vpop.f32.mrf.mxu0
    %v349 = vadd.f32 %v87, %v348
    %350 = vdwg.mxu0
    %351 = vmatpush.bf16.msra.mxu0 %v267
    %352 = vmatpush.bf16.msra.mxu0 %v262
    %353 = vmatpush.bf16.msra.mxu0 %v257
    %354 = vmatpush.bf16.msra.mxu0 %v252
    %355 = vmatpush.bf16.msra.mxu0 %v247
    %356 = vmatpush.bf16.msra.mxu0 %v242
    %357 = vmatpush.bf16.msra.mxu0 %v237
    %358 = vmatpush.bf16.msra.mxu0 %v232
    %359 = vmatmul.bf16.gmra.mxu0 %v99
    %v360 = vpop.f32.mrf.mxu0
    %v361 = vadd.f32 %v88, %v360
    %v362 = vpop.f32.mrf.mxu0
    %v363 = vadd.f32 %v88, %v362
    %364 = vdwg.mxu0
    %365 = vmatpush.bf16.msra.mxu0 %v268
    %366 = vmatpush.bf16.msra.mxu0 %v263
    %367 = vmatpush.bf16.msra.mxu0 %v258
    %368 = vmatpush.bf16.msra.mxu0 %v253
    %369 = vmatpush.bf16.msra.mxu0 %v248
    %370 = vmatpush.bf16.msra.mxu0 %v243
    %371 = vmatpush.bf16.msra.mxu0 %v238
    %372 = vmatpush.bf16.msra.mxu0 %v233
    %373 = vmatmul.bf16.gmra.mxu0 %v99
    %v374 = vpop.f32.mrf.mxu0
    %v375 = vadd.f32 %v89, %v374
    %v376 = vpop.f32.mrf.mxu0
    %v377 = vadd.f32 %v89, %v376
    %378 = vdwg.mxu0
    %v379 = vmax.f32 %v319, 0.0
    %v380 = vmax.f32 %v333, 0.0
    %v381 = vmax.f32 %v347, 0.0
    %v382 = vmax.f32 %v361, 0.0
    %v383 = vmax.f32 %v375, 0.0
    %v384 = vmax.f32 %v321, 0.0
    %v385 = vmax.f32 %v335, 0.0
    %v386 = vmax.f32 %v349, 0.0
    %v387 = vmax.f32 %v363, 0.0
    %v388 = vmax.f32 %v377, 0.0
    %v389 = vpack.c.bf16 %v384, %v379
    %v390 = vpack.c.bf16 %v385, %v380
    %v391 = vpack.c.bf16 %v386, %v381
    %v392 = vpack.c.bf16 %v387, %v382
    %v393 = vpack.c.bf16 %v388, %v383
    %v394 = vld [vmem:[%s3] sm:$0xff]
    %v395 = vld [vmem:[%s3 + $0x8] sm:$0xf]
    %v396 = vld [vmem:[%s3 + $0xc] sm:$0xff]
    %v397 = vld [vmem:[%s3 + $0x14] sm:$0xf]
    %v398 = vld [vmem:[%s3 + $0x18] sm:$0xff]
    %v399 = vld [vmem:[%s3 + $0x20] sm:$0xf]
    %v400 = vld [vmem:[%s3 + $0x24] sm:$0xff]
    %v401 = vld [vmem:[%s3 + $0x2c] sm:$0xf]
    %v402 = vld [vmem:[%s3 + $0x30] sm:$0xff]
    %v403 = vld [vmem:[%s3 + $0x38] sm:$0xf]
    %v404 = vld [vmem:[%s3 + $0x3c] sm:$0xff]
    %v405 = vld [vmem:[%s3 + $0x44] sm:$0xf]
    %v406 = vld [vmem:[%s3 + $0x48] sm:$0xff]
    %v407 = vld [vmem:[%s3 + $0x50] sm:$0xf]
    %v408 = vld [vmem:[%s3 + $0x54] sm:$0xff]
    %v409 = vld [vmem:[%s3 + $0x5c] sm:$0xf]
    %v410 = vld [vmem:[%s3 + $0x60] sm:$0xff]
    %v411 = vld [vmem:[%s3 + $0x68] sm:$0xf]
    %v412 = vld [vmem:[%s3 + $0x6c] sm:$0xff]
    %v413 = vld [vmem:[%s3 + $0x74] sm:$0xf]
    %v414 = vld [vmem:[%s3 + $0x78] sm:$0xff]
    %v415 = vld [vmem:[%s3 + $0x80] sm:$0xf]
    %v416 = vld [vmem:[%s3 + $0x84] sm:$0xff]
    %v417 = vld [vmem:[%s3 + $0x8c] sm:$0xf]
    %v418 = vld [vmem:[%s3 + $0x90] sm:$0xff]
    %v419 = vld [vmem:[%s3 + $0x98] sm:$0xf]
    %v420 = vld [vmem:[%s3 + $0x9c] sm:$0xff]
    %v421 = vld [vmem:[%s3 + $0xa4] sm:$0xf]
    %v422 = vld [vmem:[%s3 + $0xa8] sm:$0xff]
    %v423 = vld [vmem:[%s3 + $0xb0] sm:$0xf]
    %v424 = vld [vmem:[%s3 + $0xb4] sm:$0xff]
    %v425 = vld [vmem:[%s3 + $0xbc] sm:$0xf]
    %v426 = vld [vmem:[%s3 + $0xc0] sm:$0xff]
    %v427 = vld [vmem:[%s3 + $0xc8] sm:$0xf]
    %v428 = vld [vmem:[%s3 + $0xcc] sm:$0xff]
    %v429 = vld [vmem:[%s3 + $0xd4] sm:$0xf]
    %v430 = vld [vmem:[%s3 + $0xd8] sm:$0xff]
    %v431 = vld [vmem:[%s3 + $0xe0] sm:$0xf]
    %v432 = vld [vmem:[%s3 + $0xe4] sm:$0xff]
    %v433 = vld [vmem:[%s3 + $0xec] sm:$0xf]
    %v434 = vld [vmem:[%s3 + $0xf0] sm:$0xff]
    %v435 = vld [vmem:[%s3 + $0xf8] sm:$0xf]
    %v436 = vld [vmem:[%s3 + $0xfc] sm:$0xff]
    %v437 = vld [vmem:[%s3 + $0x104] sm:$0xf]
    %v438 = vld [vmem:[%s3 + $0x108] sm:$0xff]
    %v439 = vld [vmem:[%s3 + $0x110] sm:$0xf]
    %v440 = vld [vmem:[%s3 + $0x114] sm:$0xff]
    %v441 = vld [vmem:[%s3 + $0x11c] sm:$0xf]
    %v442 = vld [vmem:[%s3 + $0x120] sm:$0xff]
    %v443 = vld [vmem:[%s3 + $0x128] sm:$0xf]
    %v444 = vld [vmem:[%s3 + $0x12c] sm:$0xff]
    %v445 = vld [vmem:[%s3 + $0x134] sm:$0xf]
    %v446 = vld [vmem:[%s3 + $0x138] sm:$0xff]
    %v447 = vld [vmem:[%s3 + $0x140] sm:$0xf]
    %v448 = vld [vmem:[%s3 + $0x144] sm:$0xff]
    %v449 = vld [vmem:[%s3 + $0x14c] sm:$0xf]
    %v450 = vld [vmem:[%s3 + $0x150] sm:$0xff]
    %v451 = vld [vmem:[%s3 + $0x158] sm:$0xf]
    %v452 = vld [vmem:[%s3 + $0x15c] sm:$0xff]
    %v453 = vld [vmem:[%s3 + $0x164] sm:$0xf]
    %v454 = vld [vmem:[%s3 + $0x168] sm:$0xff]
    %v455 = vld [vmem:[%s3 + $0x170] sm:$0xf]
    %v456 = vld [vmem:[%s3 + $0x174] sm:$0xff]
    %v457 = vld [vmem:[%s3 + $0x17c] sm:$0xf]
    %v458 = vld [vmem:[%s3 + $0x180] sm:$0xff]
    %v459 = vld [vmem:[%s3 + $0x188] sm:$0xf]
    %v460 = vld [vmem:[%s3 + $0x18c] sm:$0xff]
    %v461 = vld [vmem:[%s3 + $0x194] sm:$0xf]
    %v462 = vld [vmem:[%s3 + $0x198] sm:$0xff]
    %v463 = vld [vmem:[%s3 + $0x1a0] sm:$0xf]
    %v464 = vld [vmem:[%s3 + $0x1a4] sm:$0xff]
    %v465 = vld [vmem:[%s3 + $0x1ac] sm:$0xf]
    %v466 = vld [vmem:[%s3 + $0x1b0] sm:$0xff]
    %v467 = vld [vmem:[%s3 + $0x1b8] sm:$0xf]
    %v468 = vld [vmem:[%s3 + $0x1bc] sm:$0xff]
    %v469 = vld [vmem:[%s3 + $0x1c4] sm:$0xf]
    %v470 = vld [vmem:[%s3 + $0x1c8] sm:$0xff]
    %v471 = vld [vmem:[%s3 + $0x1d0] sm:$0xf]
    %v472 = vld [vmem:[%s3 + $0x1d4] sm:$0xff]
    %v473 = vld [vmem:[%s3 + $0x1dc] sm:$0xf]
    %v474 = vld [vmem:[%s3 + $0x1e0] sm:$0xff]
    %v475 = vld [vmem:[%s3 + $0x1e8] sm:$0xf]
    %v476 = vld [vmem:[%s3 + $0x1ec] sm:$0xff]
    %v477 = vld [vmem:[%s3 + $0x1f4] sm:$0xf]
    %v478 = vld [vmem:[%s3 + $0x1f8] sm:$0xff]
    %v479 = vld [vmem:[%s3 + $0x200] sm:$0xf]
    %v480 = vld [vmem:[%s3 + $0x204] sm:$0xff]
    %v481 = vld [vmem:[%s3 + $0x20c] sm:$0xf]
    %v482 = vld [vmem:[%s3 + $0x210] sm:$0xff]
    %v483 = vld [vmem:[%s3 + $0x218] sm:$0xf]
    %v484 = vld [vmem:[%s3 + $0x21c] sm:$0xff]
    %v485 = vld [vmem:[%s3 + $0x224] sm:$0xf]
    %v486 = vld [vmem:[%s3 + $0x228] sm:$0xff]
    %v487 = vld [vmem:[%s3 + $0x230] sm:$0xf]
    %v488 = vld [vmem:[%s3 + $0x234] sm:$0xff]
    %v489 = vld [vmem:[%s3 + $0x23c] sm:$0xf]
    %v490 = vld [vmem:[%s3 + $0x240] sm:$0xff]
    %v491 = vld [vmem:[%s3 + $0x248] sm:$0xf]
    %v492 = vld [vmem:[%s3 + $0x24c] sm:$0xff]
    %v493 = vld [vmem:[%s3 + $0x254] sm:$0xf]
    %v494 = vld [vmem:[%s3 + $0x258] sm:$0xff]
    %v495 = vld [vmem:[%s3 + $0x260] sm:$0xf]
    %v496 = vld [vmem:[%s3 + $0x264] sm:$0xff]
    %v497 = vld [vmem:[%s3 + $0x26c] sm:$0xf]
    %v498 = vld [vmem:[%s3 + $0x270] sm:$0xff]
    %v499 = vld [vmem:[%s3 + $0x278] sm:$0xf]
    %v500 = vld [vmem:[%s3 + $0x27c] sm:$0xff]
    %v501 = vld [vmem:[%s3 + $0x284] sm:$0xf]
    %v502 = vld [vmem:[%s3 + $0x288] sm:$0xff]
    %v503 = vld [vmem:[%s3 + $0x290] sm:$0xf]
    %v504 = vld [vmem:[%s3 + $0x294] sm:$0xff]
    %v505 = vld [vmem:[%s3 + $0x29c] sm:$0xf]
    %v506 = vld [vmem:[%s3 + $0x2a0] sm:$0xff]
    %v507 = vld [vmem:[%s3 + $0x2a8] sm:$0xf]
    %v508 = vld [vmem:[%s3 + $0x2ac] sm:$0xff]
    %v509 = vld [vmem:[%s3 + $0x2b4] sm:$0xf]
    %v510 = vld [vmem:[%s3 + $0x2b8] sm:$0xff]
    %v511 = vld [vmem:[%s3 + $0x2c0] sm:$0xf]
    %v512 = vld [vmem:[%s3 + $0x2c4] sm:$0xff]
    %v513 = vld [vmem:[%s3 + $0x2cc] sm:$0xf]
    %v514 = vld [vmem:[%s3 + $0x2d0] sm:$0xff]
    %v515 = vld [vmem:[%s3 + $0x2d8] sm:$0xf]
    %v516 = vld [vmem:[%s3 + $0x2dc] sm:$0xff]
    %v517 = vld [vmem:[%s3 + $0x2e4] sm:$0xf]
    %v518 = vld [vmem:[%s3 + $0x2e8] sm:$0xff]
    %v519 = vld [vmem:[%s3 + $0x2f0] sm:$0xf]
    %v520 = vld [vmem:[%s3 + $0x2f4] sm:$0xff]
    %v521 = vld [vmem:[%s3 + $0x2fc] sm:$0xf]
    %v522 = vld [vmem:[%s3 + $0x300] sm:$0xff]
    %v523 = vld [vmem:[%s3 + $0x308] sm:$0xf]
    %v524 = vld [vmem:[%s3 + $0x30c] sm:$0xff]
    %v525 = vld [vmem:[%s3 + $0x314] sm:$0xf]
    %v526 = vld [vmem:[%s3 + $0x318] sm:$0xff]
    %v527 = vld [vmem:[%s3 + $0x320] sm:$0xf]
    %v528 = vld [vmem:[%s3 + $0x324] sm:$0xff]
    %v529 = vld [vmem:[%s3 + $0x32c] sm:$0xf]
    %v530 = vld [vmem:[%s3 + $0x330] sm:$0xff]
    %v531 = vld [vmem:[%s3 + $0x338] sm:$0xf]
    %v532 = vld [vmem:[%s3 + $0x33c] sm:$0xff]
    %v533 = vld [vmem:[%s3 + $0x344] sm:$0xf]
    %v534 = vld [vmem:[%s3 + $0x348] sm:$0xff]
    %v535 = vld [vmem:[%s3 + $0x350] sm:$0xf]
    %v536 = vld [vmem:[%s3 + $0x354] sm:$0xff]
    %v537 = vld [vmem:[%s3 + $0x35c] sm:$0xf]
    %v538 = vld [vmem:[%s3 + $0x360] sm:$0xff]
    %v539 = vld [vmem:[%s3 + $0x368] sm:$0xf]
    %v540 = vld [vmem:[%s3 + $0x36c] sm:$0xff]
    %v541 = vld [vmem:[%s3 + $0x374] sm:$0xf]
    %v542 = vld [vmem:[%s3 + $0x378] sm:$0xff]
    %v543 = vld [vmem:[%s3 + $0x380] sm:$0xf]
    %v544 = vld [vmem:[%s3 + $0x384] sm:$0xff]
    %v545 = vld [vmem:[%s3 + $0x38c] sm:$0xf]
    %v546 = vld [vmem:[%s3 + $0x390] sm:$0xff]
    %v547 = vld [vmem:[%s3 + $0x398] sm:$0xf]
    %v548 = vld [vmem:[%s3 + $0x39c] sm:$0xff]
    %v549 = vld [vmem:[%s3 + $0x3a4] sm:$0xf]
    %v550 = vld [vmem:[%s3 + $0x3a8] sm:$0xff]
    %v551 = vld [vmem:[%s3 + $0x3b0] sm:$0xf]
    %v552 = vld [vmem:[%s3 + $0x3b4] sm:$0xff]
    %v553 = vld [vmem:[%s3 + $0x3bc] sm:$0xf]
    %v554 = vld [vmem:[%s4] sm:$0x7]
    %v556 = vperm.slane %v554, 0
    %v557 = vperm.slane %v554, 1
    %v558 = vperm.slane %v554, 2
    %v722 = vunpack.c.l.b16 %v394
    %v723 = vunpack.c.h.b16 %v394
    %v724 = vunpack.c.l.b16 %v395
    %v725 = vunpack.c.l.b16 %v396
    %v726 = vunpack.c.h.b16 %v396
    %v727 = vunpack.c.l.b16 %v397
    %v728 = vunpack.c.l.b16 %v398
    %v729 = vunpack.c.h.b16 %v398
    %v730 = vunpack.c.l.b16 %v399
    %v731 = vunpack.c.l.b16 %v400
    %v732 = vunpack.c.h.b16 %v400
    %v733 = vunpack.c.l.b16 %v401
    %v734 = vunpack.c.l.b16 %v402
    %v735 = vunpack.c.h.b16 %v402
    %v736 = vunpack.c.l.b16 %v403
    %v737 = vunpack.c.l.b16 %v404
    %v738 = vunpack.c.h.b16 %v404
    %v739 = vunpack.c.l.b16 %v405
    %v740 = vunpack.c.l.b16 %v406
    %v741 = vunpack.c.h.b16 %v406
    %v742 = vunpack.c.l.b16 %v407
    %v743 = vunpack.c.l.b16 %v408
    %v744 = vunpack.c.h.b16 %v408
    %v745 = vunpack.c.l.b16 %v409
    %v746 = vunpack.c.l.b16 %v410
    %v747 = vunpack.c.h.b16 %v410
    %v748 = vunpack.c.l.b16 %v411
    %v749 = vunpack.c.l.b16 %v412
    %v750 = vunpack.c.h.b16 %v412
    %v751 = vunpack.c.l.b16 %v413
    %v752 = vunpack.c.l.b16 %v414
    %v753 = vunpack.c.h.b16 %v414
    %v754 = vunpack.c.l.b16 %v415
    %v755 = vunpack.c.l.b16 %v416
    %v756 = vunpack.c.h.b16 %v416
    %v757 = vunpack.c.l.b16 %v417
    %v758 = vunpack.c.l.b16 %v418
    %v759 = vunpack.c.h.b16 %v418
    %v760 = vunpack.c.l.b16 %v419
    %v761 = vunpack.c.l.b16 %v420
    %v762 = vunpack.c.h.b16 %v420
    %v763 = vunpack.c.l.b16 %v421
    %v764 = vunpack.c.l.b16 %v422
    %v765 = vunpack.c.h.b16 %v422
    %v766 = vunpack.c.l.b16 %v423
    %v767 = vunpack.c.l.b16 %v424
    %v768 = vunpack.c.h.b16 %v424
    %v769 = vunpack.c.l.b16 %v425
    %v770 = vunpack.c.l.b16 %v426
    %v771 = vunpack.c.h.b16 %v426
    %v772 = vunpack.c.l.b16 %v427
    %v773 = vunpack.c.l.b16 %v428
    %v774 = vunpack.c.h.b16 %v428
    %v775 = vunpack.c.l.b16 %v429
    %v776 = vunpack.c.l.b16 %v430
    %v777 = vunpack.c.h.b16 %v430
    %v778 = vunpack.c.l.b16 %v431
    %v779 = vunpack.c.l.b16 %v432
    %v780 = vunpack.c.h.b16 %v432
    %v781 = vunpack.c.l.b16 %v433
    %v782 = vunpack.c.l.b16 %v434
    %v783 = vunpack.c.h.b16 %v434
    %v784 = vunpack.c.l.b16 %v435
    %v785 = vunpack.c.l.b16 %v436
    %v786 = vunpack.c.h.b16 %v436
    %v787 = vunpack.c.l.b16 %v437
    %v788 = vunpack.c.l.b16 %v438
    %v789 = vunpack.c.h.b16 %v438
    %v790 = vunpack.c.l.b16 %v439
    %v791 = vunpack.c.l.b16 %v440
    %v792 = vunpack.c.h.b16 %v440
    %v793 = vunpack.c.l.b16 %v441
    %v794 = vunpack.c.l.b16 %v442
    %v795 = vunpack.c.h.b16 %v442
    %v796 = vunpack.c.l.b16 %v443
    %v797 = vunpack.c.l.b16 %v444
    %v798 = vunpack.c.h.b16 %v444
    %v799 = vunpack.c.l.b16 %v445
    %v800 = vunpack.c.l.b16 %v446
    %v801 = vunpack.c.h.b16 %v446
    %v802 = vunpack.c.l.b16 %v447
    %v803 = vunpack.c.l.b16 %v448
    %v804 = vunpack.c.h.b16 %v448
    %v805 = vunpack.c.l.b16 %v449
    %v806 = vunpack.c.l.b16 %v450
    %v807 = vunpack.c.h.b16 %v450
    %v808 = vunpack.c.l.b16 %v451
    %v809 = vunpack.c.l.b16 %v452
    %v810 = vunpack.c.h.b16 %v452
    %v811 = vunpack.c.l.b16 %v453
    %v812 = vunpack.c.l.b16 %v454
    %v813 = vunpack.c.h.b16 %v454
    %v814 = vunpack.c.l.b16 %v455
    %v815 = vunpack.c.l.b16 %v456
    %v816 = vunpack.c.h.b16 %v456
    %v817 = vunpack.c.l.b16 %v457
    %v818 = vunpack.c.l.b16 %v458
    %v819 = vunpack.c.h.b16 %v458
    %v820 = vunpack.c.l.b16 %v459
    %v821 = vunpack.c.l.b16 %v460
    %v822 = vunpack.c.h.b16 %v460
    %v823 = vunpack.c.l.b16 %v461
    %v824 = vunpack.c.l.b16 %v462
    %v825 = vunpack.c.h.b16 %v462
    %v826 = vunpack.c.l.b16 %v463
    %v827 = vunpack.c.l.b16 %v464
    %v828 = vunpack.c.h.b16 %v464
    %v829 = vunpack.c.l.b16 %v465
    %v830 = vunpack.c.l.b16 %v466
    %v831 = vunpack.c.h.b16 %v466
    %v832 = vunpack.c.l.b16 %v467
    %v833 = vunpack.c.l.b16 %v468
    %v834 = vunpack.c.h.b16 %v468
    %v835 = vunpack.c.l.b16 %v469
    %v836 = vunpack.c.l.b16 %v470
    %v837 = vunpack.c.h.b16 %v470
    %v838 = vunpack.c.l.b16 %v471
    %v839 = vunpack.c.l.b16 %v472
    %v840 = vunpack.c.h.b16 %v472
    %v841 = vunpack.c.l.b16 %v473
    %v842 = vunpack.c.l.b16 %v474
    %v843 = vunpack.c.h.b16 %v474
    %v844 = vunpack.c.l.b16 %v475
    %v845 = vunpack.c.l.b16 %v476
    %v846 = vunpack.c.h.b16 %v476
    %v847 = vunpack.c.l.b16 %v477
    %v848 = vunpack.c.l.b16 %v478
    %v849 = vunpack.c.h.b16 %v478
    %v850 = vunpack.c.l.b16 %v479
    %v851 = vunpack.c.l.b16 %v480
    %v852 = vunpack.c.h.b16 %v480
    %v853 = vunpack.c.l.b16 %v481
    %v854 = vunpack.c.l.b16 %v482
    %v855 = vunpack.c.h.b16 %v482
    %v856 = vunpack.c.l.b16 %v483
    %v857 = vunpack.c.l.b16 %v484
    %v858 = vunpack.c.h.b16 %v484
    %v859 = vunpack.c.l.b16 %v485
    %v860 = vunpack.c.l.b16 %v486
    %v861 = vunpack.c.h.b16 %v486
    %v862 = vunpack.c.l.b16 %v487
    %v863 = vunpack.c.l.b16 %v488
    %v864 = vunpack.c.h.b16 %v488
    %v865 = vunpack.c.l.b16 %v489
    %v866 = vunpack.c.l.b16 %v490
    %v867 = vunpack.c.h.b16 %v490
    %v868 = vunpack.c.l.b16 %v491
    %v869 = vunpack.c.l.b16 %v492
    %v870 = vunpack.c.h.b16 %v492
    %v871 = vunpack.c.l.b16 %v493
    %v872 = vunpack.c.l.b16 %v494
    %v873 = vunpack.c.h.b16 %v494
    %v874 = vunpack.c.l.b16 %v495
    %v875 = vunpack.c.l.b16 %v496
    %v876 = vunpack.c.h.b16 %v496
    %v877 = vunpack.c.l.b16 %v497
    %v878 = vunpack.c.l.b16 %v498
    %v879 = vunpack.c.h.b16 %v498
    %v880 = vunpack.c.l.b16 %v499
    %v881 = vunpack.c.l.b16 %v500
    %v882 = vunpack.c.h.b16 %v500
    %v883 = vunpack.c.l.b16 %v501
    %v884 = vunpack.c.l.b16 %v502
    %v885 = vunpack.c.h.b16 %v502
    %v886 = vunpack.c.l.b16 %v503
    %v887 = vunpack.c.l.b16 %v504
    %v888 = vunpack.c.h.b16 %v504
    %v889 = vunpack.c.l.b16 %v505
    %v890 = vunpack.c.l.b16 %v506
    %v891 = vunpack.c.h.b16 %v506
    %v892 = vunpack.c.l.b16 %v507
    %v893 = vunpack.c.l.b16 %v508
    %v894 = vunpack.c.h.b16 %v508
    %v895 = vunpack.c.l.b16 %v509
    %v896 = vunpack.c.l.b16 %v510
    %v897 = vunpack.c.h.b16 %v510
    %v898 = vunpack.c.l.b16 %v511
    %v899 = vunpack.c.l.b16 %v512
    %v900 = vunpack.c.h.b16 %v512
    %v901 = vunpack.c.l.b16 %v513
    %v902 = vunpack.c.l.b16 %v514
    %v903 = vunpack.c.h.b16 %v514
    %v904 = vunpack.c.l.b16 %v515
    %v905 = vunpack.c.l.b16 %v516
    %v906 = vunpack.c.h.b16 %v516
    %v907 = vunpack.c.l.b16 %v517
    %v908 = vunpack.c.l.b16 %v518
    %v909 = vunpack.c.h.b16 %v518
    %v910 = vunpack.c.l.b16 %v519
    %v911 = vunpack.c.l.b16 %v520
    %v912 = vunpack.c.h.b16 %v520
    %v913 = vunpack.c.l.b16 %v521
    %v914 = vunpack.c.l.b16 %v522
    %v915 = vunpack.c.h.b16 %v522
    %v916 = vunpack.c.l.b16 %v523
    %v917 = vunpack.c.l.b16 %v524
    %v918 = vunpack.c.h.b16 %v524
    %v919 = vunpack.c.l.b16 %v525
    %v920 = vunpack.c.l.b16 %v526
    %v921 = vunpack.c.h.b16 %v526
    %v922 = vunpack.c.l.b16 %v527
    %v923 = vunpack.c.l.b16 %v528
    %v924 = vunpack.c.h.b16 %v528
    %v925 = vunpack.c.l.b16 %v529
    %v926 = vunpack.c.l.b16 %v530
    %v927 = vunpack.c.h.b16 %v530
    %v928 = vunpack.c.l.b16 %v531
    %v929 = vunpack.c.l.b16 %v532
    %v930 = vunpack.c.h.b16 %v532
    %v931 = vunpack.c.l.b16 %v533
    %v932 = vunpack.c.l.b16 %v534
    %v933 = vunpack.c.h.b16 %v534
    %v934 = vunpack.c.l.b16 %v535
    %v935 = vunpack.c.l.b16 %v536
    %v936 = vunpack.c.h.b16 %v536
    %v937 = vunpack.c.l.b16 %v537
    %v938 = vunpack.c.l.b16 %v538
    %v939 = vunpack.c.h.b16 %v538
    %v940 = vunpack.c.l.b16 %v539
    %v941 = vunpack.c.l.b16 %v540
    %v942 = vunpack.c.h.b16 %v540
    %v943 = vunpack.c.l.b16 %v541
    %v944 = vunpack.c.l.b16 %v542
    %v945 = vunpack.c.h.b16 %v542
    %v946 = vunpack.c.l.b16 %v543
    %v947 = vunpack.c.l.b16 %v544
    %v948 = vunpack.c.h.b16 %v544
    %v949 = vunpack.c.l.b16 %v545
    %v950 = vunpack.c.l.b16 %v546
    %v951 = vunpack.c.h.b16 %v546
    %v952 = vunpack.c.l.b16 %v547
    %v953 = vunpack.c.l.b16 %v548
    %v954 = vunpack.c.h.b16 %v548
    %v955 = vunpack.c.l.b16 %v549
    %v956 = vunpack.c.l.b16 %v550
    %v957 = vunpack.c.h.b16 %v550
    %v958 = vunpack.c.l.b16 %v551
    %v959 = vunpack.c.l.b16 %v552
    %v960 = vunpack.c.h.b16 %v552
    %v961 = vunpack.c.l.b16 %v553
    %v962 = vpack.c.b16 %v725, %v722
    %v963 = vpack.c.b16 %v726, %v723
    %v964 = vpack.c.b16 %v727, %v724
    %v965 = vpack.c.b16 %v731, %v728
    %v966 = vpack.c.b16 %v732, %v729
    %v967 = vpack.c.b16 %v733, %v730
    %v968 = vpack.c.b16 %v737, %v734
    %v969 = vpack.c.b16 %v738, %v735
    %v970 = vpack.c.b16 %v739, %v736
    %v971 = vpack.c.b16 %v743, %v740
    %v972 = vpack.c.b16 %v744, %v741
    %v973 = vpack.c.b16 %v745, %v742
    %v974 = vpack.c.b16 %v749, %v746
    %v975 = vpack.c.b16 %v750, %v747
    %v976 = vpack.c.b16 %v751, %v748
    %v977 = vpack.c.b16 %v755, %v752
    %v978 = vpack.c.b16 %v756, %v753
    %v979 = vpack.c.b16 %v757, %v754
    %v980 = vpack.c.b16 %v761, %v758
    %v981 = vpack.c.b16 %v762, %v759
    %v982 = vpack.c.b16 %v763, %v760
    %v983 = vpack.c.b16 %v767, %v764
    %v984 = vpack.c.b16 %v768, %v765
    %v985 = vpack.c.b16 %v769, %v766
    %v986 = vpack.c.b16 %v773, %v770
    %v987 = vpack.c.b16 %v774, %v771
    %v988 = vpack.c.b16 %v775, %v772
    %v989 = vpack.c.b16 %v779, %v776
    %v990 = vpack.c.b16 %v780, %v777
    %v991 = vpack.c.b16 %v781, %v778
    %v992 = vpack.c.b16 %v785, %v782
    %v993 = vpack.c.b16 %v786, %v783
    %v994 = vpack.c.b16 %v787, %v784
    %v995 = vpack.c.b16 %v791, %v788
    %v996 = vpack.c.b16 %v792, %v789
    %v997 = vpack.c.b16 %v793, %v790
    %v998 = vpack.c.b16 %v797, %v794
    %v999 = vpack.c.b16 %v798, %v795
    %v1000 = vpack.c.b16 %v799, %v796
    %v1001 = vpack.c.b16 %v803, %v800
    %v1002 = vpack.c.b16 %v804, %v801
    %v1003 = vpack.c.b16 %v805, %v802
    %v1004 = vpack.c.b16 %v809, %v806
    %v1005 = vpack.c.b16 %v810, %v807
    %v1006 = vpack.c.b16 %v811, %v808
    %v1007 = vpack.c.b16 %v815, %v812
    %v1008 = vpack.c.b16 %v816, %v813
    %v1009 = vpack.c.b16 %v817, %v814
    %v1010 = vpack.c.b16 %v821, %v818
    %v1011 = vpack.c.b16 %v822, %v819
    %v1012 = vpack.c.b16 %v823, %v820
    %v1013 = vpack.c.b16 %v827, %v824
    %v1014 = vpack.c.b16 %v828, %v825
    %v1015 = vpack.c.b16 %v829, %v826
    %v1016 = vpack.c.b16 %v833, %v830
    %v1017 = vpack.c.b16 %v834, %v831
    %v1018 = vpack.c.b16 %v835, %v832
    %v1019 = vpack.c.b16 %v839, %v836
    %v1020 = vpack.c.b16 %v840, %v837
    %v1021 = vpack.c.b16 %v841, %v838
    %v1022 = vpack.c.b16 %v845, %v842
    %v1023 = vpack.c.b16 %v846, %v843
    %v1024 = vpack.c.b16 %v847, %v844
    %v1025 = vpack.c.b16 %v851, %v848
    %v1026 = vpack.c.b16 %v852, %v849
    %v1027 = vpack.c.b16 %v853, %v850
    %v1028 = vpack.c.b16 %v857, %v854
    %v1029 = vpack.c.b16 %v858, %v855
    %v1030 = vpack.c.b16 %v859, %v856
    %v1031 = vpack.c.b16 %v863, %v860
    %v1032 = vpack.c.b16 %v864, %v861
    %v1033 = vpack.c.b16 %v865, %v862
    %v1034 = vpack.c.b16 %v869, %v866
    %v1035 = vpack.c.b16 %v870, %v867
    %v1036 = vpack.c.b16 %v871, %v868
    %v1037 = vpack.c.b16 %v875, %v872
    %v1038 = vpack.c.b16 %v876, %v873
    %v1039 = vpack.c.b16 %v877, %v874
    %v1040 = vpack.c.b16 %v881, %v878
    %v1041 = vpack.c.b16 %v882, %v879
    %v1042 = vpack.c.b16 %v883, %v880
    %v1043 = vpack.c.b16 %v887, %v884
    %v1044 = vpack.c.b16 %v888, %v885
    %v1045 = vpack.c.b16 %v889, %v886
    %v1046 = vpack.c.b16 %v893, %v890
    %v1047 = vpack.c.b16 %v894, %v891
    %v1048 = vpack.c.b16 %v895, %v892
    %v1049 = vpack.c.b16 %v899, %v896
    %v1050 = vpack.c.b16 %v900, %v897
    %v1051 = vpack.c.b16 %v901, %v898
    %v1052 = vpack.c.b16 %v905, %v902
    %v1053 = vpack.c.b16 %v906, %v903
    %v1054 = vpack.c.b16 %v907, %v904
    %v1055 = vpack.c.b16 %v911, %v908
    %v1056 = vpack.c.b16 %v912, %v909
    %v1057 = vpack.c.b16 %v913, %v910
    %v1058 = vpack.c.b16 %v917, %v914
    %v1059 = vpack.c.b16 %v918, %v915
    %v1060 = vpack.c.b16 %v919, %v916
    %v1061 = vpack.c.b16 %v923, %v920
    %v1062 = vpack.c.b16 %v924, %v921
    %v1063 = vpack.c.b16 %v925, %v922
    %v1064 = vpack.c.b16 %v929, %v926
    %v1065 = vpack.c.b16 %v930, %v927
    %v1066 = vpack.c.b16 %v931, %v928
    %v1067 = vpack.c.b16 %v935, %v932
    %v1068 = vpack.c.b16 %v936, %v933
    %v1069 = vpack.c.b16 %v937, %v934
    %v1070 = vpack.c.b16 %v941, %v938
    %v1071 = vpack.c.b16 %v942, %v939
    %v1072 = vpack.c.b16 %v943, %v940
    %v1073 = vpack.c.b16 %v947, %v944
    %v1074 = vpack.c.b16 %v948, %v945
    %v1075 = vpack.c.b16 %v949, %v946
    %v1076 = vpack.c.b16 %v953, %v950
    %v1077 = vpack.c.b16 %v954, %v951
    %v1078 = vpack.c.b16 %v955, %v952
    %v1079 = vpack.c.b16 %v959, %v956
    %v1080 = vpack.c.b16 %v960, %v957
    %v1081 = vpack.c.b16 %v961, %v958
    %1202 = vmatpush.bf16.msra.mxu0 %v983
    %1203 = vmatpush.bf16.msra.mxu0 %v980
    %1204 = vmatpush.bf16.msra.mxu0 %v977
    %1205 = vmatpush.bf16.msra.mxu0 %v974
    %1206 = vmatpush.bf16.msra.mxu0 %v971
    %1207 = vmatpush.bf16.msra.mxu0 %v968
    %1208 = vmatpush.bf16.msra.mxu0 %v965
    %1209 = vmatpush.bf16.msra.mxu0 %v962
    %1210 = vmatmul.bf16.gmra.mxu0 %v389
    %v1211 = vpop.f32.mrf.mxu0
    %v1212 = vadd.f32 %v556, %v1211
    %v1213 = vpop.f32.mrf.mxu0
    %v1214 = vadd.f32 %v556, %v1213
    %1215 = vdwg.mxu0
    %1216 = vmatpush.bf16.msra.mxu0 %v1007
    %1217 = vmatpush.bf16.msra.mxu0 %v1004
    %1218 = vmatpush.bf16.msra.mxu0 %v1001
    %1219 = vmatpush.bf16.msra.mxu0 %v998
    %1220 = vmatpush.bf16.msra.mxu0 %v995
    %1221 = vmatpush.bf16.msra.mxu0 %v992
    %1222 = vmatpush.bf16.msra.mxu0 %v989
    %1223 = vmatpush.bf16.msra.mxu0 %v986
    %1224 = vmatmul.bf16.gmra.mxu0 %v390
    %v1225 = vpop.f32.mrf.mxu0
    %v1226 = vadd.f32 %v1212, %v1225
    %v1227 = vpop.f32.mrf.mxu0
    %v1228 = vadd.f32 %v1214, %v1227
    %1229 = vdwg.mxu0
    %1230 = vmatpush.bf16.msra.mxu0 %v1031
    %1231 = vmatpush.bf16.msra.mxu0 %v1028
    %1232 = vmatpush.bf16.msra.mxu0 %v1025
    %1233 = vmatpush.bf16.msra.mxu0 %v1022
    %1234 = vmatpush.bf16.msra.mxu0 %v1019
    %1235 = vmatpush.bf16.msra.mxu0 %v1016
    %1236 = vmatpush.bf16.msra.mxu0 %v1013
    %1237 = vmatpush.bf16.msra.mxu0 %v1010
    %1238 = vmatmul.bf16.gmra.mxu0 %v391
    %v1239 = vpop.f32.mrf.mxu0
    %v1240 = vadd.f32 %v1226, %v1239
    %v1241 = vpop.f32.mrf.mxu0
    %v1242 = vadd.f32 %v1228, %v1241
    %1243 = vdwg.mxu0
    %1244 = vmatpush.bf16.msra.mxu0 %v1055
    %1245 = vmatpush.bf16.msra.mxu0 %v1052
    %1246 = vmatpush.bf16.msra.mxu0 %v1049
    %1247 = vmatpush.bf16.msra.mxu0 %v1046
    %1248 = vmatpush.bf16.msra.mxu0 %v1043
    %1249 = vmatpush.bf16.msra.mxu0 %v1040
    %1250 = vmatpush.bf16.msra.mxu0 %v1037
    %1251 = vmatpush.bf16.msra.mxu0 %v1034
    %1252 = vmatmul.bf16.gmra.mxu0 %v392
    %v1253 = vpop.f32.mrf.mxu0
    %v1254 = vadd.f32 %v1240, %v1253
    %v1255 = vpop.f32.mrf.mxu0
    %v1256 = vadd.f32 %v1242, %v1255
    %1257 = vdwg.mxu0
    %1258 = vmatpush.bf16.msra.mxu0 %v1079
    %1259 = vmatpush.bf16.msra.mxu0 %v1076
    %1260 = vmatpush.bf16.msra.mxu0 %v1073
    %1261 = vmatpush.bf16.msra.mxu0 %v1070
    %1262 = vmatpush.bf16.msra.mxu0 %v1067
    %1263 = vmatpush.bf16.msra.mxu0 %v1064
    %1264 = vmatpush.bf16.msra.mxu0 %v1061
    %1265 = vmatpush.bf16.msra.mxu0 %v1058
    %1266 = vmatmul.bf16.gmra.mxu0 %v393
    %v1267 = vpop.f32.mrf.mxu0
    %v1268 = vadd.f32 %v1254, %v1267
    %v1269 = vpop.f32.mrf.mxu0
    %v1270 = vadd.f32 %v1256, %v1269
    %1271 = vdwg.mxu0
    %1272 = vmatpush.bf16.msra.mxu0 %v984
    %1273 = vmatpush.bf16.msra.mxu0 %v981
    %1274 = vmatpush.bf16.msra.mxu0 %v978
    %1275 = vmatpush.bf16.msra.mxu0 %v975
    %1276 = vmatpush.bf16.msra.mxu0 %v972
    %1277 = vmatpush.bf16.msra.mxu0 %v969
    %1278 = vmatpush.bf16.msra.mxu0 %v966
    %1279 = vmatpush.bf16.msra.mxu0 %v963
    %1280 = vmatmul.bf16.gmra.mxu0 %v389
    %v1281 = vpop.f32.mrf.mxu0
    %v1282 = vadd.f32 %v557, %v1281
    %v1283 = vpop.f32.mrf.mxu0
    %v1284 = vadd.f32 %v557, %v1283
    %1285 = vdwg.mxu0
    %1286 = vmatpush.bf16.msra.mxu0 %v1008
    %1287 = vmatpush.bf16.msra.mxu0 %v1005
    %1288 = vmatpush.bf16.msra.mxu0 %v1002
    %1289 = vmatpush.bf16.msra.mxu0 %v999
    %1290 = vmatpush.bf16.msra.mxu0 %v996
    %1291 = vmatpush.bf16.msra.mxu0 %v993
    %1292 = vmatpush.bf16.msra.mxu0 %v990
    %1293 = vmatpush.bf16.msra.mxu0 %v987
    %1294 = vmatmul.bf16.gmra.mxu0 %v390
    %v1295 = vpop.f32.mrf.mxu0
    %v1296 = vadd.f32 %v1282, %v1295
    %v1297 = vpop.f32.mrf.mxu0
    %v1298 = vadd.f32 %v1284, %v1297
    %1299 = vdwg.mxu0
    %1300 = vmatpush.bf16.msra.mxu0 %v1032
    %1301 = vmatpush.bf16.msra.mxu0 %v1029
    %1302 = vmatpush.bf16.msra.mxu0 %v1026
    %1303 = vmatpush.bf16.msra.mxu0 %v1023
    %1304 = vmatpush.bf16.msra.mxu0 %v1020
    %1305 = vmatpush.bf16.msra.mxu0 %v1017
    %1306 = vmatpush.bf16.msra.mxu0 %v1014
    %1307 = vmatpush.bf16.msra.mxu0 %v1011
    %1308 = vmatmul.bf16.gmra.mxu0 %v391
    %v1309 = vpop.f32.mrf.mxu0
    %v1310 = vadd.f32 %v1296, %v1309
    %v1311 = vpop.f32.mrf.mxu0
    %v1312 = vadd.f32 %v1298, %v1311
    %1313 = vdwg.mxu0
    %1314 = vmatpush.bf16.msra.mxu0 %v1056
    %1315 = vmatpush.bf16.msra.mxu0 %v1053
    %1316 = vmatpush.bf16.msra.mxu0 %v1050
    %1317 = vmatpush.bf16.msra.mxu0 %v1047
    %1318 = vmatpush.bf16.msra.mxu0 %v1044
    %1319 = vmatpush.bf16.msra.mxu0 %v1041
    %1320 = vmatpush.bf16.msra.mxu0 %v1038
    %1321 = vmatpush.bf16.msra.mxu0 %v1035
    %1322 = vmatmul.bf16.gmra.mxu0 %v392
    %v1323 = vpop.f32.mrf.mxu0
    %v1324 = vadd.f32 %v1310, %v1323
    %v1325 = vpop.f32.mrf.mxu0
    %v1326 = vadd.f32 %v1312, %v1325
    %1327 = vdwg.mxu0
    %1328 = vmatpush.bf16.msra.mxu0 %v1080
    %1329 = vmatpush.bf16.msra.mxu0 %v1077
    %1330 = vmatpush.bf16.msra.mxu0 %v1074
    %1331 = vmatpush.bf16.msra.mxu0 %v1071
    %1332 = vmatpush.bf16.msra.mxu0 %v1068
    %1333 = vmatpush.bf16.msra.mxu0 %v1065
    %1334 = vmatpush.bf16.msra.mxu0 %v1062
    %1335 = vmatpush.bf16.msra.mxu0 %v1059
    %1336 = vmatmul.bf16.gmra.mxu0 %v393
    %v1337 = vpop.f32.mrf.mxu0
    %v1338 = vadd.f32 %v1324, %v1337
    %v1339 = vpop.f32.mrf.mxu0
    %v1340 = vadd.f32 %v1326, %v1339
    %1341 = vdwg.mxu0
    %1342 = vmatpush.bf16.msra.mxu0 %v985
    %1343 = vmatpush.bf16.msra.mxu0 %v982
    %1344 = vmatpush.bf16.msra.mxu0 %v979
    %1345 = vmatpush.bf16.msra.mxu0 %v976
    %1346 = vmatpush.bf16.msra.mxu0 %v973
    %1347 = vmatpush.bf16.msra.mxu0 %v970
    %1348 = vmatpush.bf16.msra.mxu0 %v967
    %1349 = vmatpush.bf16.msra.mxu0 %v964
    %1350 = vmatmul.bf16.gmra.mxu0 %v389
    %v1351 = vpop.f32.mrf.mxu0
    %v1352 = vadd.f32 %v558, %v1351
    %v1353 = vpop.f32.mrf.mxu0
    %v1354 = vadd.f32 %v558, %v1353
    %1355 = vdwg.mxu0
    %1356 = vmatpush.bf16.msra.mxu0 %v1009
    %1357 = vmatpush.bf16.msra.mxu0 %v1006
    %1358 = vmatpush.bf16.msra.mxu0 %v1003
    %1359 = vmatpush.bf16.msra.mxu0 %v1000
    %1360 = vmatpush.bf16.msra.mxu0 %v997
    %1361 = vmatpush.bf16.msra.mxu0 %v994
    %1362 = vmatpush.bf16.msra.mxu0 %v991
    %1363 = vmatpush.bf16.msra.mxu0 %v988
    %1364 = vmatmul.bf16.gmra.mxu0 %v390
    %v1365 = vpop.f32.mrf.mxu0
    %v1366 = vadd.f32 %v1352, %v1365
    %v1367 = vpop.f32.mrf.mxu0
    %v1368 = vadd.f32 %v1354, %v1367
    %1369 = vdwg.mxu0
    %1370 = vmatpush.bf16.msra.mxu0 %v1033
    %1371 = vmatpush.bf16.msra.mxu0 %v1030
    %1372 = vmatpush.bf16.msra.mxu0 %v1027
    %1373 = vmatpush.bf16.msra.mxu0 %v1024
    %1374 = vmatpush.bf16.msra.mxu0 %v1021
    %1375 = vmatpush.bf16.msra.mxu0 %v1018
    %1376 = vmatpush.bf16.msra.mxu0 %v1015
    %1377 = vmatpush.bf16.msra.mxu0 %v1012
    %1378 = vmatmul.bf16.gmra.mxu0 %v391
    %v1379 = vpop.f32.mrf.mxu0
    %v1380 = vadd.f32 %v1366, %v1379
    %v1381 = vpop.f32.mrf.mxu0
    %v1382 = vadd.f32 %v1368, %v1381
    %1383 = vdwg.mxu0
    %1384 = vmatpush.bf16.msra.mxu0 %v1057
    %1385 = vmatpush.bf16.msra.mxu0 %v1054
    %1386 = vmatpush.bf16.msra.mxu0 %v1051
    %1387 = vmatpush.bf16.msra.mxu0 %v1048
    %1388 = vmatpush.bf16.msra.mxu0 %v1045
    %1389 = vmatpush.bf16.msra.mxu0 %v1042
    %1390 = vmatpush.bf16.msra.mxu0 %v1039
    %1391 = vmatpush.bf16.msra.mxu0 %v1036
    %1392 = vmatmul.bf16.gmra.mxu0 %v392
    %v1393 = vpop.f32.mrf.mxu0
    %v1394 = vadd.f32 %v1380, %v1393
    %v1395 = vpop.f32.mrf.mxu0
    %v1396 = vadd.f32 %v1382, %v1395
    %1397 = vdwg.mxu0
    %1398 = vmatpush.bf16.msra.mxu0 %v1081
    %1399 = vmatpush.bf16.msra.mxu0 %v1078
    %1400 = vmatpush.bf16.msra.mxu0 %v1075
    %1401 = vmatpush.bf16.msra.mxu0 %v1072
    %1402 = vmatpush.bf16.msra.mxu0 %v1069
    %1403 = vmatpush.bf16.msra.mxu0 %v1066
    %1404 = vmatpush.bf16.msra.mxu0 %v1063
    %1405 = vmatpush.bf16.msra.mxu0 %v1060
    %1406 = vmatmul.bf16.gmra.mxu0 %v393
    %v1407 = vpop.f32.mrf.mxu0
    %v1408 = vadd.f32 %v1394, %v1407
    %v1409 = vpop.f32.mrf.mxu0
    %v1410 = vadd.f32 %v1396, %v1409
    %1411 = vdwg.mxu0
    %v1412 = vmax.f32 %v1268, 0.0
    %v1413 = vmax.f32 %v1338, 0.0
    %v1414 = vmax.f32 %v1408, 0.0
    %v1415 = vmax.f32 %v1270, 0.0
    %v1416 = vmax.f32 %v1340, 0.0
    %v1417 = vmax.f32 %v1410, 0.0
    %v1418 = vpack.c.bf16 %v1415, %v1412
    %v1419 = vpack.c.bf16 %v1416, %v1413
    %v1420 = vpack.c.bf16 %v1417, %v1414
    %v1421 = vld [vmem:[%s5] sm:$0xf]
    %v1422 = vld [vmem:[%s5 + $0x4] sm:$0xf]
    %v1423 = vld [vmem:[%s5 + $0x8] sm:$0xf]
    %v1424 = vld [vmem:[%s5 + $0xc] sm:$0xf]
    %v1425 = vld [vmem:[%s5 + $0x10] sm:$0xf]
    %v1426 = vld [vmem:[%s5 + $0x14] sm:$0xf]
    %v1427 = vld [vmem:[%s5 + $0x18] sm:$0xf]
    %v1428 = vld [vmem:[%s5 + $0x1c] sm:$0xf]
    %v1429 = vld [vmem:[%s5 + $0x20] sm:$0xf]
    %v1430 = vld [vmem:[%s5 + $0x24] sm:$0xf]
    %v1431 = vld [vmem:[%s5 + $0x28] sm:$0xf]
    %v1432 = vld [vmem:[%s5 + $0x2c] sm:$0xf]
    %v1433 = vld [vmem:[%s5 + $0x30] sm:$0xf]
    %v1434 = vld [vmem:[%s5 + $0x34] sm:$0xf]
    %v1435 = vld [vmem:[%s5 + $0x38] sm:$0xf]
    %v1436 = vld [vmem:[%s5 + $0x3c] sm:$0xf]
    %v1437 = vld [vmem:[%s5 + $0x40] sm:$0xf]
    %v1438 = vld [vmem:[%s5 + $0x44] sm:$0xf]
    %v1439 = vld [vmem:[%s5 + $0x48] sm:$0xf]
    %v1440 = vld [vmem:[%s5 + $0x4c] sm:$0xf]
    %v1441 = vld [vmem:[%s5 + $0x50] sm:$0xf]
    %v1442 = vld [vmem:[%s5 + $0x54] sm:$0xf]
    %v1443 = vld [vmem:[%s5 + $0x58] sm:$0xf]
    %v1444 = vld [vmem:[%s5 + $0x5c] sm:$0xf]
    %v1445 = vld [vmem:[%s5 + $0x60] sm:$0xf]
    %v1446 = vld [vmem:[%s5 + $0x64] sm:$0xf]
    %v1447 = vld [vmem:[%s5 + $0x68] sm:$0xf]
    %v1448 = vld [vmem:[%s5 + $0x6c] sm:$0xf]
    %v1449 = vld [vmem:[%s5 + $0x70] sm:$0xf]
    %v1450 = vld [vmem:[%s5 + $0x74] sm:$0xf]
    %v1451 = vld [vmem:[%s5 + $0x78] sm:$0xf]
    %v1452 = vld [vmem:[%s5 + $0x7c] sm:$0xf]
    %v1453 = vld [vmem:[%s5 + $0x80] sm:$0xf]
    %v1454 = vld [vmem:[%s5 + $0x84] sm:$0xf]
    %v1455 = vld [vmem:[%s5 + $0x88] sm:$0xf]
    %v1456 = vld [vmem:[%s5 + $0x8c] sm:$0xf]
    %v1457 = vld [vmem:[%s5 + $0x90] sm:$0xf]
    %v1458 = vld [vmem:[%s5 + $0x94] sm:$0xf]
    %v1459 = vld [vmem:[%s5 + $0x98] sm:$0xf]
    %v1460 = vld [vmem:[%s5 + $0x9c] sm:$0xf]
    %v1461 = vld [vmem:[%s5 + $0xa0] sm:$0xf]
    %v1462 = vld [vmem:[%s5 + $0xa4] sm:$0xf]
    %v1463 = vld [vmem:[%s5 + $0xa8] sm:$0xf]
    %v1464 = vld [vmem:[%s5 + $0xac] sm:$0xf]
    %v1465 = vld [vmem:[%s5 + $0xb0] sm:$0xf]
    %v1466 = vld [vmem:[%s5 + $0xb4] sm:$0xf]
    %v1467 = vld [vmem:[%s5 + $0xb8] sm:$0xf]
    %v1468 = vld [vmem:[%s5 + $0xbc] sm:$0xf]
    %v1469 = vld [vmem:[%s6] sm:$0x1]
    %v1471 = vperm.slane %v1469, 0
    %v1521 = vunpack.c.l.b16 %v1421
    %v1522 = vunpack.c.l.b16 %v1422
    %v1523 = vunpack.c.l.b16 %v1423
    %v1524 = vunpack.c.l.b16 %v1424
    %v1525 = vunpack.c.l.b16 %v1425
    %v1526 = vunpack.c.l.b16 %v1426
    %v1527 = vunpack.c.l.b16 %v1427
    %v1528 = vunpack.c.l.b16 %v1428
    %v1529 = vunpack.c.l.b16 %v1429
    %v1530 = vunpack.c.l.b16 %v1430
    %v1531 = vunpack.c.l.b16 %v1431
    %v1532 = vunpack.c.l.b16 %v1432
    %v1533 = vunpack.c.l.b16 %v1433
    %v1534 = vunpack.c.l.b16 %v1434
    %v1535 = vunpack.c.l.b16 %v1435
    %v1536 = vunpack.c.l.b16 %v1436
    %v1537 = vunpack.c.l.b16 %v1437
    %v1538 = vunpack.c.l.b16 %v1438
    %v1539 = vunpack.c.l.b16 %v1439
    %v1540 = vunpack.c.l.b16 %v1440
    %v1541 = vunpack.c.l.b16 %v1441
    %v1542 = vunpack.c.l.b16 %v1442
    %v1543 = vunpack.c.l.b16 %v1443
    %v1544 = vunpack.c.l.b16 %v1444
    %v1545 = vunpack.c.l.b16 %v1445
    %v1546 = vunpack.c.l.b16 %v1446
    %v1547 = vunpack.c.l.b16 %v1447
    %v1548 = vunpack.c.l.b16 %v1448
    %v1549 = vunpack.c.l.b16 %v1449
    %v1550 = vunpack.c.l.b16 %v1450
    %v1551 = vunpack.c.l.b16 %v1451
    %v1552 = vunpack.c.l.b16 %v1452
    %v1553 = vunpack.c.l.b16 %v1453
    %v1554 = vunpack.c.l.b16 %v1454
    %v1555 = vunpack.c.l.b16 %v1455
    %v1556 = vunpack.c.l.b16 %v1456
    %v1557 = vunpack.c.l.b16 %v1457
    %v1558 = vunpack.c.l.b16 %v1458
    %v1559 = vunpack.c.l.b16 %v1459
    %v1560 = vunpack.c.l.b16 %v1460
    %v1561 = vunpack.c.l.b16 %v1461
    %v1562 = vunpack.c.l.b16 %v1462
    %v1563 = vunpack.c.l.b16 %v1463
    %v1564 = vunpack.c.l.b16 %v1464
    %v1565 = vunpack.c.l.b16 %v1465
    %v1566 = vunpack.c.l.b16 %v1466
    %v1567 = vunpack.c.l.b16 %v1467
    %v1568 = vunpack.c.l.b16 %v1468
    %v1569 = vpack.c.b16 %v1522, %v1521
    %v1570 = vpack.c.b16 %v1524, %v1523
    %v1571 = vpack.c.b16 %v1526, %v1525
    %v1572 = vpack.c.b16 %v1528, %v1527
    %v1573 = vpack.c.b16 %v1530, %v1529
    %v1574 = vpack.c.b16 %v1532, %v1531
    %v1575 = vpack.c.b16 %v1534, %v1533
    %v1576 = vpack.c.b16 %v1536, %v1535
    %v1577 = vpack.c.b16 %v1538, %v1537
    %v1578 = vpack.c.b16 %v1540, %v1539
    %v1579 = vpack.c.b16 %v1542, %v1541
    %v1580 = vpack.c.b16 %v1544, %v1543
    %v1581 = vpack.c.b16 %v1546, %v1545
    %v1582 = vpack.c.b16 %v1548, %v1547
    %v1583 = vpack.c.b16 %v1550, %v1549
    %v1584 = vpack.c.b16 %v1552, %v1551
    %v1585 = vpack.c.b16 %v1554, %v1553
    %v1586 = vpack.c.b16 %v1556, %v1555
    %v1587 = vpack.c.b16 %v1558, %v1557
    %v1588 = vpack.c.b16 %v1560, %v1559
    %v1589 = vpack.c.b16 %v1562, %v1561
    %v1590 = vpack.c.b16 %v1564, %v1563
    %v1591 = vpack.c.b16 %v1566, %v1565
    %v1592 = vpack.c.b16 %v1568, %v1567
    %1617 = vmatpush.bf16.msra.mxu0 %v1576
    %1618 = vmatpush.bf16.msra.mxu0 %v1575
    %1619 = vmatpush.bf16.msra.mxu0 %v1574
    %1620 = vmatpush.bf16.msra.mxu0 %v1573
    %1621 = vmatpush.bf16.msra.mxu0 %v1572
    %1622 = vmatpush.bf16.msra.mxu0 %v1571
    %1623 = vmatpush.bf16.msra.mxu0 %v1570
    %1624 = vmatpush.bf16.msra.mxu0 %v1569
    %1625 = vmatmul.bf16.gmra.mxu0 %v1418
    %v1626 = vpop.f32.mrf.mxu0
    %v1627 = vadd.f32 %v1471, %v1626
    %v1628 = vpop.f32.mrf.mxu0
    %v1629 = vadd.f32 %v1471, %v1628
    %1630 = vdwg.mxu0
    %1631 = vmatpush.bf16.msra.mxu0 %v1584
    %1632 = vmatpush.bf16.msra.mxu0 %v1583
    %1633 = vmatpush.bf16.msra.mxu0 %v1582
    %1634 = vmatpush.bf16.msra.mxu0 %v1581
    %1635 = vmatpush.bf16.msra.mxu0 %v1580
    %1636 = vmatpush.bf16.msra.mxu0 %v1579
    %1637 = vmatpush.bf16.msra.mxu0 %v1578
    %1638 = vmatpush.bf16.msra.mxu0 %v1577
    %1639 = vmatmul.bf16.gmra.mxu0 %v1419
    %v1640 = vpop.f32.mrf.mxu0
    %v1641 = vadd.f32 %v1627, %v1640
    %v1642 = vpop.f32.mrf.mxu0
    %v1643 = vadd.f32 %v1629, %v1642
    %1644 = vdwg.mxu0
    %1645 = vmatpush.bf16.msra.mxu0 %v1592
    %1646 = vmatpush.bf16.msra.mxu0 %v1591
    %1647 = vmatpush.bf16.msra.mxu0 %v1590
    %1648 = vmatpush.bf16.msra.mxu0 %v1589
    %1649 = vmatpush.bf16.msra.mxu0 %v1588
    %1650 = vmatpush.bf16.msra.mxu0 %v1587
    %1651 = vmatpush.bf16.msra.mxu0 %v1586
    %1652 = vmatpush.bf16.msra.mxu0 %v1585
    %1653 = vmatmul.bf16.gmra.mxu0 %v1420
    %v1654 = vpop.f32.mrf.mxu0
    %v1655 = vadd.f32 %v1641, %v1654
    %v1656 = vpop.f32.mrf.mxu0
    %v1657 = vadd.f32 %v1643, %v1656
    %1658 = vdwg.mxu0
    %v1659 = vmax.f32 %v1655, 0.0
    %v1660 = vmax.f32 %v1657, 0.0
    %v1661 = vpack.c.bf16 %v1660, %v1659
    %v1662 = vld [vmem:[%s7] sm:$0xf]
    %v1663 = vld [vmem:[%s7 + $0x4] sm:$0xf]
    %v1664 = vld [vmem:[%s7 + $0x8] sm:$0xf]
    %v1665 = vld [vmem:[%s7 + $0xc] sm:$0xf]
    %v1666 = vld [vmem:[%s7 + $0x10] sm:$0xf]
    %v1667 = vld [vmem:[%s7 + $0x14] sm:$0xf]
    %v1668 = vld [vmem:[%s7 + $0x18] sm:$0xf]
    %v1669 = vld [vmem:[%s7 + $0x1c] sm:$0xf]
    %v1670 = vld [vmem:[%s7 + $0x20] sm:$0xf]
    %v1671 = vld [vmem:[%s7 + $0x24] sm:$0xf]
    %v1672 = vld [vmem:[%s7 + $0x28] sm:$0xf]
    %v1673 = vld [vmem:[%s7 + $0x2c] sm:$0xf]
    %v1674 = vld [vmem:[%s7 + $0x30] sm:$0xf]
    %v1675 = vld [vmem:[%s7 + $0x34] sm:$0xf]
    %v1676 = vld [vmem:[%s7 + $0x38] sm:$0xf]
    %v1677 = vld [vmem:[%s7 + $0x3c] sm:$0xf]
    %v1678 = vld [vmem:[%s8] sm:$0x1]
    %v1680 = vperm.slane %v1678, 0
    %v1698 = vunpack.c.l.b16 %v1662
    %v1699 = vunpack.c.l.b16 %v1663
    %v1700 = vunpack.c.l.b16 %v1664
    %v1701 = vunpack.c.l.b16 %v1665
    %v1702 = vunpack.c.l.b16 %v1666
    %v1703 = vunpack.c.l.b16 %v1667
    %v1704 = vunpack.c.l.b16 %v1668
    %v1705 = vunpack.c.l.b16 %v1669
    %v1706 = vunpack.c.l.b16 %v1670
    %v1707 = vunpack.c.l.b16 %v1671
    %v1708 = vunpack.c.l.b16 %v1672
    %v1709 = vunpack.c.l.b16 %v1673
    %v1710 = vunpack.c.l.b16 %v1674
    %v1711 = vunpack.c.l.b16 %v1675
    %v1712 = vunpack.c.l.b16 %v1676
    %v1713 = vunpack.c.l.b16 %v1677
    %v1714 = vpack.c.b16 %v1699, %v1698
    %v1715 = vpack.c.b16 %v1701, %v1700
    %v1716 = vpack.c.b16 %v1703, %v1702
    %v1717 = vpack.c.b16 %v1705, %v1704
    %v1718 = vpack.c.b16 %v1707, %v1706
    %v1719 = vpack.c.b16 %v1709, %v1708
    %v1720 = vpack.c.b16 %v1711, %v1710
    %v1721 = vpack.c.b16 %v1713, %v1712
    %1730 = vmatpush.bf16.msra.mxu0 %v1721
    %1731 = vmatpush.bf16.msra.mxu0 %v1720
    %1732 = vmatpush.bf16.msra.mxu0 %v1719
    %1733 = vmatpush.bf16.msra.mxu0 %v1718
    %1734 = vmatpush.bf16.msra.mxu0 %v1717
    %1735 = vmatpush.bf16.msra.mxu0 %v1716
    %1736 = vmatpush.bf16.msra.mxu0 %v1715
    %1737 = vmatpush.bf16.msra.mxu0 %v1714
    %1738 = vmatmul.bf16.gmra.mxu0 %v1661
    %v1739 = vpop.f32.mrf.mxu0
    %v1740 = vadd.f32 %v1680, %v1739
    %v1741 = vpop.f32.mrf.mxu0
    %v1742 = vadd.f32 %v1680, %v1741
    %1743 = vdwg.mxu0
    %1744 = vst [vmem:[#allocation2] sm:$0xff] %v1740
    %1745 = vst [vmem:[#allocation2 + $0x8] sm:$0xff] %v1742
    // Predicated region
    $region38: #{three_layer_mlp_forward.1} parent=1 // pred_check
      _
    $region39: #{three_layer_mlp_forward.1} parent=1 // pred_check_branch
      %1747 = sbr.rel (0) target = $region41
    $region40: #{three_layer_mlp_forward.1} parent=1 // pred_region
      %1749 = vsyncadd [#allocation3], 0
      %s1750 = sshll.u32 [#allocation2], 4
      %s1751 = int_to_ptr.vmem [resolvable:$true] %s1750
      %s1752 = sshll.u32 %s9, 4
      %s1753 = int_to_ptr.hbm [resolvable:$true] %s1752
      %1758 = dma.vmem_to_hbm [thread:$0]  %s1751, 256, %s1753, [#allocation3], 128, 128, 8
    $region41: #{three_layer_mlp_forward.1} parent=1 // pred_fallthru
      _
    // Predicated region
    $region42: #{three_layer_mlp_forward.1} parent=1 // pred_check
      _
    $region43: #{three_layer_mlp_forward.1} parent=1 // pred_check_branch
      %1760 = sbr.rel (0) target = $region45
    $region44: #{three_layer_mlp_forward.1} parent=1 // pred_region
      %1762 = dma.done [#allocation3], 256
    $region45: #{three_layer_mlp_forward.1} parent=1 // pred_fallthru
      _
    %1763 = vsyncpa [#allocation3], 1

</llo_original>
